<compile_context>
chip_gen: v7x
topology: tpu7x:2x2x1
jax: 0.10.0
libtpu: 0.0.40
codegen_flags: <defaults>
</compile_context>

<pallas_src>
import functools

import jax
import jax.numpy as jnp
from jax.experimental import pallas as pl
from jax.experimental.pallas import tpu as pltpu


def _caan_kernel(x_ref, wqkv_ref, bqkv_ref, ww_ref, bw_ref, o_ref, *,
                 block_b, n_assets, dim):
    BB, N, D = block_b, n_assets, dim

    # (BB, N, D) -> (BB*N, D): one big row-slab for the fused projection.
    x2d = x_ref[...].reshape(BB * N, D)

    # Fused Q/K/V projection: single MXU matmul, f32 accumulation.
    qkv = jnp.dot(x2d, wqkv_ref[...],
                  preferred_element_type=jnp.float32) + bqkv_ref[...]

    q = qkv[:, 0 * D:1 * D].reshape(BB, N, D)   # scale already folded into Wq/bq
    k = qkv[:, 1 * D:2 * D].reshape(BB, N, D)
    v = qkv[:, 2 * D:3 * D].reshape(BB, N, D)

    # beta[b, n, m] = sum_d q[b,n,d] * k[b,m,d]  (no explicit k.T)
    beta = jax.lax.dot_general(
        q, k,
        dimension_numbers=(((2,), (2,)), ((0,), (0,))),
        preferred_element_type=jnp.float32)                      # (BB, N, N)

    # Numerically-stable softmax over the last axis (matches F.softmax(dim=-1)).
    beta_max = jnp.max(beta, axis=-1, keepdims=True)
    beta_exp = jnp.exp(beta - beta_max)
    beta_sum = jnp.sum(beta_exp, axis=-1, keepdims=True)
    attn = beta_exp * pl.reciprocal(beta_sum, approx=True)       # (BB, N, N)

    # sum(value.unsqueeze(1) * beta, dim=2) == attn @ V (batched).
    ctx = jax.lax.dot_general(
        attn, v,
        dimension_numbers=(((2,), (1,)), ((0,), (0,))),
        preferred_element_type=jnp.float32)                      # (BB, N, D)

    # Winner head: broadcast multiply + lane reduction instead of (D,1) matvec.
    scores = jnp.sum(ctx * ww_ref[...], axis=-1) + bw_ref[0, 0]  # (BB, N)

    # Lane-dense write: one flat (1, BB*N) slab per grid step.
    o_ref[...] = scores.reshape(1, BB * N)


def caan_forward(x, params, *, block_b=None):
    """x: (B, N, D) float32; params: dict of weights. Returns (B, N) scores."""
    B, N, D = x.shape

    if block_b is None:
        # Make the per-step output slab at least 128 lanes wide.
        block_b = max(1, pl.cdiv(128, N))
    BB = block_b

    nb = pl.cdiv(B, BB)
    B_pad = nb * BB
    if B_pad != B:
        x = jnp.pad(x, ((0, B_pad - B), (0, 0), (0, 0)))

    # Fold the 1/sqrt(D) attention scale into the query weights/bias and fuse QKV.
    scale = 1.0 / jnp.sqrt(jnp.float32(D))
    wqkv = jnp.concatenate(
        [params["wq"] * scale, params["wk"], params["wv"]], axis=1)   # (D, 3D)
    bqkv = jnp.concatenate(
        [params["bq"] * scale, params["bk"], params["bv"]], axis=1)   # (1, 3D)
    ww_row = params["ww"].reshape(1, D)                               # (1, D)
    bw = params["bw"].reshape(1, 1)                                   # SMEM scalar

    kernel = functools.partial(_caan_kernel, block_b=BB, n_assets=N, dim=D)

    out = pl.pallas_call(
        kernel,
        out_shape=jax.ShapeDtypeStruct((nb, BB * N), jnp.float32),
        grid_spec=pltpu.PrefetchScalarGridSpec(
            num_scalar_prefetch=0,
            grid=(nb,),
            in_specs=[
                pl.BlockSpec((BB, N, D), lambda g: (g, 0, 0)),        # x slab
                pl.BlockSpec((D, 3 * D), lambda g: (0, 0)),           # fused QKV W
                pl.BlockSpec((1, 3 * D), lambda g: (0, 0)),           # fused QKV b
                pl.BlockSpec((1, D), lambda g: (0, 0)),               # winner W row
                pl.BlockSpec(memory_space=pltpu.MemorySpace.SMEM),    # winner bias
            ],
            out_specs=pl.BlockSpec((1, BB * N), lambda g: (g, 0)),
        ),
        compiler_params=pltpu.CompilerParams(
            dimension_semantics=("parallel",),
        ),
    )(x, wqkv, bqkv, ww_row, bw)

    return out.reshape(B_pad, N)[:B]


def _reference(x, params):
    """Pure-JAX reference mirroring the PyTorch forward exactly."""
    q = x @ params["wq"] + params["bq"][0]
    k = x @ params["wk"] + params["bk"][0]
    v = x @ params["wv"] + params["bv"][0]
    beta = jnp.einsum("bnd,bmd->bnm", q, k) / jnp.sqrt(jnp.float32(x.shape[-1]))
    beta = jax.nn.softmax(beta, axis=-1)[..., None]              # (B, N, N, 1)
    ctx = jnp.sum(v[:, None, :, :] * beta, axis=2)               # (B, N, D)
    return (ctx @ params["ww"] + params["bw"][0, 0])[..., 0]     # (B, N)


def init_params(key, dim_embedding):
    D = dim_embedding
    keys = jax.random.split(key, 8)
    scale = 1.0 / jnp.sqrt(jnp.float32(D))
    return {
        "wq": jax.random.uniform(keys[0], (D, D), jnp.float32, -scale, scale),
        "bq": jax.random.uniform(keys[1], (1, D), jnp.float32, -scale, scale),
        "wk": jax.random.uniform(keys[2], (D, D), jnp.float32, -scale, scale),
        "bk": jax.random.uniform(keys[3], (1, D), jnp.float32, -scale, scale),
        "wv": jax.random.uniform(keys[4], (D, D), jnp.float32, -scale, scale),
        "bv": jax.random.uniform(keys[5], (1, D), jnp.float32, -scale, scale),
        "ww": jax.random.uniform(keys[6], (D, 1), jnp.float32, -scale, scale),
        "bw": jax.random.uniform(keys[7], (1, 1), jnp.float32, -scale, scale),
    }


if __name__ == "__main__":
    N, D = 8, 32  # num_assets, DIM_EMBEDDING

    key = jax.random.PRNGKey(0)
    k_x, k_p, k_x2 = jax.random.split(key, 3)
    params = init_params(k_p, D)

    # Tolerance is slightly looser than f32 exact because the softmax denominator
    # uses the EUP approximate reciprocal (pl.reciprocal(approx=True)).
    TOL = 2e-3

    # Primary small case (B=2): exercises the zero-padded single-block path.
    x = jax.random.normal(k_x, (2, N, D), jnp.float32)
    scores = caan_forward(x, params)
    jax.block_until_ready(scores)
    ref = _reference(x, params)
    assert scores.shape == (2, N)
    assert jnp.allclose(scores, ref, atol=TOL, rtol=TOL)

    # Larger batch with a ragged tail: exercises multi-step grid + tail padding.
    x2 = jax.random.normal(k_x2, (37, N, D), jnp.float32)
    scores2 = caan_forward(x2, params)
    jax.block_until_ready(scores2)
    ref2 = _reference(x2, params)
    assert scores2.shape == (37, N)
    assert jnp.allclose(scores2, ref2, atol=TOL, rtol=TOL)

    print("KERNEL_OK")
</pallas_src>

<mosaic_0001>
module attributes {stable_mosaic.version = 11 : i64} {
  func.func @_caan_kernel(%arg0: i32, %arg1: memref<16x8x32xf32, #tpu.memory_space<vmem>>, %arg2: memref<32x96xf32, #tpu.memory_space<vmem>>, %arg3: memref<1x96xf32, #tpu.memory_space<vmem>>, %arg4: memref<1x32xf32, #tpu.memory_space<vmem>>, %arg5: memref<1x1xf32, #tpu.memory_space<smem>>, %arg6: memref<1x128xf32, #tpu.memory_space<vmem>>) attributes {dimension_semantics = [#tpu.dimension_semantics<parallel>], iteration_bounds = array<i64: 1>, scalar_prefetch = 0 : i64, scratch_operands = 0 : i64, tpu.core_type = #tpu.core_type<tc>, window_params = [{transform_indices = @transform_0, window_bounds = array<i64: 16, 8, 32>}, {pipeline_mode = #tpu.pipeline_mode<synchronous>, transform_indices = @transform_1, window_bounds = array<i64: 32, 96>}, {pipeline_mode = #tpu.pipeline_mode<synchronous>, transform_indices = @transform_2, window_bounds = array<i64: 1, 96>}, {pipeline_mode = #tpu.pipeline_mode<synchronous>, transform_indices = @transform_3, window_bounds = array<i64: 1, 32>}, {transform_indices = @transform_4, window_bounds = array<i64: 1, 1>}, {transform_indices = @transform_5, window_bounds = array<i64: 1, 128>}]} {
    %c0 = arith.constant 0 : index
    %c0_0 = arith.constant 0 : index
    %c0_1 = arith.constant 0 : index
    %0 = vector.load %arg1[%c0, %c0_0, %c0_1] : memref<16x8x32xf32, #tpu.memory_space<vmem>>, vector<16x8x32xf32>
    %1 = vector.shape_cast %0 : vector<16x8x32xf32> to vector<128x32xf32>
    %c0_2 = arith.constant 0 : index
    %c0_3 = arith.constant 0 : index
    %2 = vector.load %arg2[%c0_2, %c0_3] : memref<32x96xf32, #tpu.memory_space<vmem>>, vector<32x96xf32>
    %cst = arith.constant dense<0.000000e+00> : vector<128x96xf32>
    %3 = tpu.matmul %1, %2, %cst {dimension_numbers = #tpu.dot_dimension_numbers<[1], [0], [0], [1], [0, 0, 1, 1], [], []>} : vector<128x32xf32>, vector<32x96xf32>, vector<128x96xf32> -> vector<128x96xf32>
    %c0_4 = arith.constant 0 : index
    %c0_5 = arith.constant 0 : index
    %4 = vector.load %arg3[%c0_4, %c0_5] : memref<1x96xf32, #tpu.memory_space<vmem>>, vector<1x96xf32>
    %5 = vector.broadcast %4 : vector<1x96xf32> to vector<128x96xf32>
    %6 = arith.addf %3, %5 : vector<128x96xf32>
    %7 = vector.extract_strided_slice %6 {offsets = [0, 0], sizes = [128, 32], strides = [1, 1]} : vector<128x96xf32> to vector<128x32xf32>
    %8 = vector.shape_cast %7 : vector<128x32xf32> to vector<16x8x32xf32>
    %9 = vector.extract_strided_slice %6 {offsets = [0, 32], sizes = [128, 32], strides = [1, 1]} : vector<128x96xf32> to vector<128x32xf32>
    %10 = vector.shape_cast %9 : vector<128x32xf32> to vector<16x8x32xf32>
    %11 = vector.extract_strided_slice %6 {offsets = [0, 64], sizes = [128, 32], strides = [1, 1]} : vector<128x96xf32> to vector<128x32xf32>
    %12 = vector.shape_cast %11 : vector<128x32xf32> to vector<16x8x32xf32>
    %cst_6 = arith.constant dense<0.000000e+00> : vector<16x8x8xf32>
    %13 = tpu.matmul %8, %10, %cst_6 {dimension_numbers = #tpu.dot_dimension_numbers<[2], [2], [1], [1], [0, 0, 0, 1, 1, 1], [0], [0]>} : vector<16x8x32xf32>, vector<16x8x32xf32>, vector<16x8x8xf32> -> vector<16x8x8xf32>
    %cst_7 = arith.constant dense<0xFF800000> : vector<16x8xf32>
    %14 = vector.multi_reduction <maximumf>, %13, %cst_7 [2] : vector<16x8x8xf32> to vector<16x8xf32>
    %15 = vector.shape_cast %14 : vector<16x8xf32> to vector<16x8x1xf32>
    %16 = vector.broadcast %15 : vector<16x8x1xf32> to vector<16x8x8xf32>
    %17 = arith.subf %13, %16 : vector<16x8x8xf32>
    %18 = math.exp %17 : vector<16x8x8xf32>
    %cst_8 = arith.constant dense<0.000000e+00> : vector<16x8xf32>
    %19 = vector.multi_reduction <add>, %18, %cst_8 [2] : vector<16x8x8xf32> to vector<16x8xf32>
    %20 = vector.shape_cast %19 : vector<16x8xf32> to vector<16x8x1xf32>
    %21 = tpu.reciprocal %20 {approx = true} : vector<16x8x1xf32> -> vector<16x8x1xf32>
    %22 = vector.broadcast %21 : vector<16x8x1xf32> to vector<16x8x8xf32>
    %23 = arith.mulf %18, %22 : vector<16x8x8xf32>
    %cst_9 = arith.constant dense<0.000000e+00> : vector<16x8x32xf32>
    %24 = tpu.matmul %23, %12, %cst_9 {dimension_numbers = #tpu.dot_dimension_numbers<[2], [1], [1], [2], [0, 0, 0, 1, 1, 2], [0], [0]>} : vector<16x8x8xf32>, vector<16x8x32xf32>, vector<16x8x32xf32> -> vector<16x8x32xf32>
    %c0_10 = arith.constant 0 : index
    %c0_11 = arith.constant 0 : index
    %25 = vector.load %arg4[%c0_10, %c0_11] : memref<1x32xf32, #tpu.memory_space<vmem>>, vector<1x32xf32>
    %26 = vector.shape_cast %25 : vector<1x32xf32> to vector<1x1x32xf32>
    %27 = vector.broadcast %26 : vector<1x1x32xf32> to vector<16x8x32xf32>
    %28 = arith.mulf %24, %27 : vector<16x8x32xf32>
    %cst_12 = arith.constant dense<0.000000e+00> : vector<16x8xf32>
    %29 = vector.multi_reduction <add>, %28, %cst_12 [2] : vector<16x8x32xf32> to vector<16x8xf32>
    %c0_13 = arith.constant 0 : index
    %c0_14 = arith.constant 0 : index
    %30 = memref.load %arg5[%c0_13, %c0_14] : memref<1x1xf32, #tpu.memory_space<smem>>
    %31 = vector.broadcast %30 : f32 to vector<16x8xf32>
    %32 = arith.addf %29, %31 : vector<16x8xf32>
    %33 = vector.shape_cast %32 : vector<16x8xf32> to vector<1x128xf32>
    %c0_15 = arith.constant 0 : index
    %c0_16 = arith.constant 0 : index
    %34 = vector.load %arg6[%c0_15, %c0_16] : memref<1x128xf32, #tpu.memory_space<vmem>>, vector<1x128xf32>
    tpu.vector_store %arg6[%c0_15, %c0_16], %33 {strides = array<i32>} : memref<1x128xf32, #tpu.memory_space<vmem>>, vector<1x128xf32>,
    return
  }
  func.func @transform_0(%arg0: i32) -> (i32, i32, i32) {
    %c0_i32 = arith.constant 0 : i32
    %c0_i32_0 = arith.constant 0 : i32
    %c0_i32_1 = arith.constant 0 : i32
    return %arg0, %c0_i32, %c0_i32_0 : i32, i32, i32
  }
  func.func @transform_1(%arg0: i32) -> (i32, i32) {
    %c0_i32 = arith.constant 0 : i32
    %c0_i32_0 = arith.constant 0 : i32
    %c0_i32_1 = arith.constant 0 : i32
    return %c0_i32, %c0_i32_0 : i32, i32
  }
  func.func @transform_2(%arg0: i32) -> (i32, i32) {
    %c0_i32 = arith.constant 0 : i32
    %c0_i32_0 = arith.constant 0 : i32
    %c0_i32_1 = arith.constant 0 : i32
    return %c0_i32, %c0_i32_0 : i32, i32
  }
  func.func @transform_3(%arg0: i32) -> (i32, i32) {
    %c0_i32 = arith.constant 0 : i32
    %c0_i32_0 = arith.constant 0 : i32
    %c0_i32_1 = arith.constant 0 : i32
    return %c0_i32, %c0_i32_0 : i32, i32
  }
  func.func @transform_4(%arg0: i32) -> (i32, i32) {
    %c0_i32 = arith.constant 0 : i32
    %c0_i32_0 = arith.constant 0 : i32
    %c0_i32_1 = arith.constant 0 : i32
    return %c0_i32, %c0_i32_0 : i32, i32
  }
  func.func @transform_5(%arg0: i32) -> (i32, i32) {
    %c0_i32 = arith.constant 0 : i32
    %c0_i32_0 = arith.constant 0 : i32
    return %arg0, %c0_i32 : i32, i32
  }
}

</mosaic_0001>

<llo_original>
// kernel: tpu_custom_call.1
$region0: #{tpu_custom_call.1}
  #allocation0 [shape = 'u32[]', space=smem, size = 0x4, offset = 0x4, fixed_abs, tag = 'smem constant byte address 0x4 - core index']
  #allocation1 [shape = 'u32[144,128]{1,0:T(1,128)}', space=vmem, size = 0x12000, scoped, tag = 'internal scratch']
  #allocation2 [shape = 'f32[1,1]{1,0:T(1,128)S(6)}', space=smem, size = 0x200, scoped, tag = 'scoped memory for tpu_custom_call.1']
  %s0 = inlined_call_operand.hbm [shape: f32[16,8,32], index: 0, kind: input, shape index: {}]
  %s1 = inlined_call_operand.hbm [shape: f32[32,96], index: 1, kind: input, shape index: {}]
  %s2 = inlined_call_operand.vmem [shape: f32[1,96], index: 2, kind: input, shape index: {}]
  %s3 = inlined_call_operand.vmem [shape: f32[1,32], index: 3, kind: input, shape index: {}]
  %s4 = inlined_call_operand.<no memory space> [shape: f32[1,1], index: 4, kind: input, shape index: {}]
  %s5 = inlined_call_operand.hbm [shape: f32[1,128], index: 5, kind: output, shape index: {}]
  %s6 = sld [smem:[#allocation0]]
  $region38: #{tpu_custom_call.1} parent=0
    _
  %s8 = ssub.s32 1, %s6
  %s9 = scalar_select 0, %s8, %s6
  %10 = sst [smem:[#allocation2]] %s4
  $region1: #{tpu_custom_call.1} parent=0
    #allocation3 [shape = 'u8[65536]{0}', space=vmem, size = 0x10000, scoped, tag = 'input window, operand 0, single buffered']
    #allocation4 [shape = 's32[1]{0}', space=sflag, size = 0x4, scoped, tag = 'scoped memory for tpu_custom_call.1']
    #allocation5 [shape = 's32[1]{0}', space=sflag, size = 0x4, scoped, tag = 'scoped memory for tpu_custom_call.1']
    #allocation6 [shape = 'u8[16384]{0}', space=vmem, size = 0x4000, scoped, tag = 'input window, operand 1, single buffered']
    #allocation7 [shape = 's32[1]{0}', space=sflag, size = 0x4, scoped, tag = 'scoped memory for tpu_custom_call.1']
    #allocation8 [shape = 'u8[512]{0}', space=vmem, size = 0x400, scoped, tag = 'output window, operand 0, single buffered']
    %11 = vsyncpa [#allocation4], 0
    %12 = vsyncpa [#allocation7], 0
    %13 = vsyncpa [#allocation5], 0
    // Predicated region
    $region2: #{tpu_custom_call.1} parent=1 // pred_check
      _
    $region3: #{tpu_custom_call.1} parent=1 // pred_check_branch
      %15 = sbr.rel (0) target = $region5
    $region4: #{tpu_custom_call.1} parent=1 // pred_region
      %s17 = ssub.s32 2048, 2048
      %18 = vsyncadd [#allocation4], %s17
      %s19 = sshll.u32 [#allocation3], 4
      %s20 = int_to_ptr.vmem [resolvable:$true] %s19
      %25 = dma.hbm_to_vmem [thread:$0]  %s0, 2048, %s20, [#allocation4], 128, 128, 8
    $region5: #{tpu_custom_call.1} parent=1 // pred_fallthru
      _
    // Predicated region
    $region6: #{tpu_custom_call.1} parent=1 // pred_check
      _
    $region7: #{tpu_custom_call.1} parent=1 // pred_check_branch
      %27 = sbr.rel (0) target = $region9
    $region8: #{tpu_custom_call.1} parent=1 // pred_region
      %s29 = ssub.s32 512, 512
      %30 = vsyncadd [#allocation7], %s29
      %s31 = sshll.u32 [#allocation6], 4
      %s32 = int_to_ptr.vmem [resolvable:$true] %s31
      %37 = dma.hbm_to_vmem [thread:$0]  %s1, 512, %s32, [#allocation7], 128, 128, 8
    $region9: #{tpu_custom_call.1} parent=1 // pred_fallthru
      _
    // Predicated region
    $region10: #{tpu_custom_call.1} parent=1 // pred_check
      _
    $region11: #{tpu_custom_call.1} parent=1 // pred_check_branch
      %39 = sbr.rel (0) target = $region13
    $region12: #{tpu_custom_call.1} parent=1 // pred_region
      _
    $region13: #{tpu_custom_call.1} parent=1 // pred_fallthru
      _
    // Predicated region
    $region14: #{tpu_custom_call.1} parent=1 // pred_check
      _
    $region15: #{tpu_custom_call.1} parent=1 // pred_check_branch
      %41 = sbr.rel (0) target = $region17
    $region16: #{tpu_custom_call.1} parent=1 // pred_region
      _
    $region17: #{tpu_custom_call.1} parent=1 // pred_fallthru
      _
    // Predicated region
    $region18: #{tpu_custom_call.1} parent=1 // pred_check
      _
    $region19: #{tpu_custom_call.1} parent=1 // pred_check_branch
      %43 = sbr.rel (0) target = $region21
    $region20: #{tpu_custom_call.1} parent=1 // pred_region
      _
    $region21: #{tpu_custom_call.1} parent=1 // pred_fallthru
      _
    // Predicated region
    $region22: #{tpu_custom_call.1} parent=1 // pred_check
      _
    $region23: #{tpu_custom_call.1} parent=1 // pred_check_branch
      %45 = sbr.rel (0) target = $region25
    $region24: #{tpu_custom_call.1} parent=1 // pred_region
      %46 = dma.done [#allocation4], 2048
    $region25: #{tpu_custom_call.1} parent=1 // pred_fallthru
      _
    // Predicated region
    $region26: #{tpu_custom_call.1} parent=1 // pred_check
      _
    $region27: #{tpu_custom_call.1} parent=1 // pred_check_branch
      %48 = sbr.rel (0) target = $region29
    $region28: #{tpu_custom_call.1} parent=1 // pred_region
      %49 = dma.done [#allocation7], 512
    $region29: #{tpu_custom_call.1} parent=1 // pred_fallthru
      _
    %v50 = vld [vmem:[#allocation3] sm:$0xff]
    %v51 = vld [vmem:[#allocation3 + $0x8] sm:$0xff]
    %v52 = vld [vmem:[#allocation3 + $0x10] sm:$0xff]
    %v53 = vld [vmem:[#allocation3 + $0x18] sm:$0xff]
    %v54 = vld [vmem:[#allocation3 + $0x20] sm:$0xff]
    %v55 = vld [vmem:[#allocation3 + $0x28] sm:$0xff]
    %v56 = vld [vmem:[#allocation3 + $0x30] sm:$0xff]
    %v57 = vld [vmem:[#allocation3 + $0x38] sm:$0xff]
    %v58 = vld [vmem:[#allocation3 + $0x40] sm:$0xff]
    %v59 = vld [vmem:[#allocation3 + $0x48] sm:$0xff]
    %v60 = vld [vmem:[#allocation3 + $0x50] sm:$0xff]
    %v61 = vld [vmem:[#allocation3 + $0x58] sm:$0xff]
    %v62 = vld [vmem:[#allocation3 + $0x60] sm:$0xff]
    %v63 = vld [vmem:[#allocation3 + $0x68] sm:$0xff]
    %v64 = vld [vmem:[#allocation3 + $0x70] sm:$0xff]
    %v65 = vld [vmem:[#allocation3 + $0x78] sm:$0xff]
    %v66 = vld [vmem:[#allocation6] sm:$0xff]
    %v67 = vld [vmem:[#allocation6 + $0x8] sm:$0xff]
    %v68 = vld [vmem:[#allocation6 + $0x10] sm:$0xff]
    %v69 = vld [vmem:[#allocation6 + $0x18] sm:$0xff]
    %v70 = vld [vmem:[%s2] sm:$0x1]
    %v72 = vlaneseq
    %v73 = vshrl.u32 %v72, 7
    %v74 = vsub.s32 0, %v73
    %v75 = vrot.slane %v70, %v74
    %vm77 = vcmask 261120
    %v79 = vsel %vm77, %v50, 0
    %v82 = vsel %vm77, %v51, 0
    %v85 = vsel %vm77, %v52, 0
    %v88 = vsel %vm77, %v53, 0
    %v91 = vsel %vm77, %v54, 0
    %v94 = vsel %vm77, %v55, 0
    %v97 = vsel %vm77, %v56, 0
    %v100 = vsel %vm77, %v57, 0
    %v103 = vsel %vm77, %v58, 0
    %v106 = vsel %vm77, %v59, 0
    %v109 = vsel %vm77, %v60, 0
    %v112 = vsel %vm77, %v61, 0
    %v115 = vsel %vm77, %v62, 0
    %v118 = vsel %vm77, %v63, 0
    %v121 = vsel %vm77, %v64, 0
    %v124 = vsel %vm77, %v65, 0
    %126 = vmatprep.subr.mxu0 0.0
    %127 = vmatpush1.msra.mxu0 %v66
    %128 = vmatprep.subr.mxu0 0.0
    %129 = vmatpush1.msra.mxu0 %v67
    %130 = vmatprep.subr.mxu0 0.0
    %131 = vmatpush1.msra.mxu0 %v68
    %132 = vmatprep.subr.mxu0 0.0
    %133 = vmatpush1.msra.mxu0 %v69
    %134 = vmatprep.subr.mxu0 0.0
    %135 = vmatpush1.msra.mxu0 0.0
    %136 = vmatprep.subr.mxu0 0.0
    %137 = vmatpush1.msra.mxu0 0.0
    %138 = vmatprep.subr.mxu0 0.0
    %139 = vmatpush1.msra.mxu0 0.0
    %140 = vmatprep.subr.mxu0 0.0
    %141 = vmatpush1.msra.mxu0 0.0
    %142 = vmatprep.subr.mxu0 0.0
    %143 = vmatpush1.msra.mxu0 0.0
    %144 = vmatprep.subr.mxu0 0.0
    %145 = vmatpush1.msra.mxu0 0.0
    %146 = vmatprep.subr.mxu0 0.0
    %147 = vmatpush1.msra.mxu0 0.0
    %148 = vmatprep.subr.mxu0 0.0
    %149 = vmatpush1.msra.mxu0 0.0
    %150 = vmatprep.subr.mxu0 0.0
    %151 = vmatpush1.msra.mxu0 0.0
    %152 = vmatprep.subr.mxu0 0.0
    %153 = vmatpush1.msra.mxu0 0.0
    %154 = vmatprep.subr.mxu0 0.0
    %155 = vmatpush1.msra.mxu0 0.0
    %156 = vmatprep.subr.mxu0 0.0
    %157 = vmatpush1.msra.mxu0 0.0
    %158 = vmatprep.subr.mxu0 0.0
    %159 = vmatpush1.msra.mxu0 0.0
    %160 = vmatprep.subr.mxu0 0.0
    %161 = vmatpush1.msra.mxu0 0.0
    %162 = vmatprep.subr.mxu0 0.0
    %163 = vmatpush1.msra.mxu0 0.0
    %164 = vmatprep.subr.mxu0 0.0
    %165 = vmatpush1.msra.mxu0 0.0
    %166 = vmatprep.subr.mxu0 0.0
    %167 = vmatpush1.msra.mxu0 0.0
    %168 = vmatprep.subr.mxu0 0.0
    %169 = vmatpush1.msra.mxu0 0.0
    %170 = vmatprep.subr.mxu0 0.0
    %171 = vmatpush1.msra.mxu0 0.0
    %172 = vmatprep.subr.mxu0 0.0
    %173 = vmatpush1.msra.mxu0 0.0
    %174 = vmatprep.subr.mxu0 0.0
    %175 = vmatpush1.msra.mxu0 0.0
    %176 = vmatprep.subr.mxu0 0.0
    %177 = vmatpush1.msra.mxu0 0.0
    %178 = vmatprep.subr.mxu0 0.0
    %179 = vmatpush1.msra.mxu0 0.0
    %180 = vmatprep.subr.mxu0 0.0
    %181 = vmatpush1.msra.mxu0 0.0
    %182 = vmatprep.subr.mxu0 0.0
    %183 = vmatpush1.msra.mxu0 0.0
    %184 = vmatprep.subr.mxu0 0.0
    %185 = vmatpush1.msra.mxu0 0.0
    %186 = vmatprep.subr.mxu0 0.0
    %187 = vmatpush1.msra.mxu0 0.0
    %188 = vmatprep.subr.mxu0 0.0
    %189 = vmatpush1.msra.mxu0 0.0
    %190 = vmatprep.mubr.f32.mxu0 0.0
    %191 = vmatmul.mubr.f32.gmra.mrb[0].mxu0 %v79
    %v192 = vpop.f32.mrb[0].mxu0
    %v193 = vadd.f32 %v75, %v192
    %v194 = vpop.f32.mrb[0].mxu0
    %195 = vmatprep.mubr.f32.mxu0 0.0
    %196 = vmatmul.mubr.f32.gmra.mrb[0].mxu0 %v82
    %v197 = vpop.f32.mrb[0].mxu0
    %v198 = vadd.f32 %v75, %v197
    %v199 = vpop.f32.mrb[0].mxu0
    %200 = vmatprep.mubr.f32.mxu0 0.0
    %201 = vmatmul.mubr.f32.gmra.mrb[0].mxu0 %v85
    %v202 = vpop.f32.mrb[0].mxu0
    %v203 = vadd.f32 %v75, %v202
    %v204 = vpop.f32.mrb[0].mxu0
    %205 = vmatprep.mubr.f32.mxu0 0.0
    %206 = vmatmul.mubr.f32.gmra.mrb[0].mxu0 %v88
    %v207 = vpop.f32.mrb[0].mxu0
    %v208 = vadd.f32 %v75, %v207
    %v209 = vpop.f32.mrb[0].mxu0
    %210 = vmatprep.mubr.f32.mxu0 0.0
    %211 = vmatmul.mubr.f32.gmra.mrb[0].mxu0 %v91
    %v212 = vpop.f32.mrb[0].mxu0
    %v213 = vadd.f32 %v75, %v212
    %v214 = vpop.f32.mrb[0].mxu0
    %215 = vmatprep.mubr.f32.mxu0 0.0
    %216 = vmatmul.mubr.f32.gmra.mrb[0].mxu0 %v94
    %v217 = vpop.f32.mrb[0].mxu0
    %v218 = vadd.f32 %v75, %v217
    %v219 = vpop.f32.mrb[0].mxu0
    %220 = vmatprep.mubr.f32.mxu0 0.0
    %221 = vmatmul.mubr.f32.gmra.mrb[0].mxu0 %v97
    %v222 = vpop.f32.mrb[0].mxu0
    %v223 = vadd.f32 %v75, %v222
    %v224 = vpop.f32.mrb[0].mxu0
    %225 = vmatprep.mubr.f32.mxu0 0.0
    %226 = vmatmul.mubr.f32.gmra.mrb[0].mxu0 %v100
    %v227 = vpop.f32.mrb[0].mxu0
    %v228 = vadd.f32 %v75, %v227
    %v229 = vpop.f32.mrb[0].mxu0
    %230 = vmatprep.mubr.f32.mxu0 0.0
    %231 = vmatmul.mubr.f32.gmra.mrb[0].mxu0 %v103
    %v232 = vpop.f32.mrb[0].mxu0
    %v233 = vadd.f32 %v75, %v232
    %v234 = vpop.f32.mrb[0].mxu0
    %235 = vmatprep.mubr.f32.mxu0 0.0
    %236 = vmatmul.mubr.f32.gmra.mrb[0].mxu0 %v106
    %v237 = vpop.f32.mrb[0].mxu0
    %v238 = vadd.f32 %v75, %v237
    %v239 = vpop.f32.mrb[0].mxu0
    %240 = vmatprep.mubr.f32.mxu0 0.0
    %241 = vmatmul.mubr.f32.gmra.mrb[0].mxu0 %v109
    %v242 = vpop.f32.mrb[0].mxu0
    %v243 = vadd.f32 %v75, %v242
    %v244 = vpop.f32.mrb[0].mxu0
    %245 = vmatprep.mubr.f32.mxu0 0.0
    %246 = vmatmul.mubr.f32.gmra.mrb[0].mxu0 %v112
    %v247 = vpop.f32.mrb[0].mxu0
    %v248 = vadd.f32 %v75, %v247
    %v249 = vpop.f32.mrb[0].mxu0
    %250 = vmatprep.mubr.f32.mxu0 0.0
    %251 = vmatmul.mubr.f32.gmra.mrb[0].mxu0 %v115
    %v252 = vpop.f32.mrb[0].mxu0
    %v253 = vadd.f32 %v75, %v252
    %v254 = vpop.f32.mrb[0].mxu0
    %255 = vmatprep.mubr.f32.mxu0 0.0
    %256 = vmatmul.mubr.f32.gmra.mrb[0].mxu0 %v118
    %v257 = vpop.f32.mrb[0].mxu0
    %v258 = vadd.f32 %v75, %v257
    %v259 = vpop.f32.mrb[0].mxu0
    %260 = vmatprep.mubr.f32.mxu0 0.0
    %261 = vmatmul.mubr.f32.gmra.mrb[0].mxu0 %v121
    %v262 = vpop.f32.mrb[0].mxu0
    %v263 = vadd.f32 %v75, %v262
    %v264 = vpop.f32.mrb[0].mxu0
    %265 = vmatprep.mubr.f32.mxu0 0.0
    %266 = vmatmul.mubr.f32.gmra.mrb[0].mxu0 %v124
    %v267 = vpop.f32.mrb[0].mxu0
    %v268 = vadd.f32 %v75, %v267
    %v269 = vpop.f32.mrb[0].mxu0
    %270 = vdwg.mxu0
    %272 = vrot.lane.b32.xlu0 %v193, 96
    %v273 = vpop.permute.xlu0 %272
    %v274 = vsel %vm77, %v193, 0
    %v276 = vsel %vm77, %v273, 0
    %278 = vmatprep.subr.mxu0 0.0
    %279 = vmatpush1.xpose.msra.mxu0 %v276
    %280 = vmatprep.subr.mxu0 0.0
    %281 = vmatpush1.xpose.msra.mxu0 0.0
    %282 = vmatprep.subr.mxu0 0.0
    %283 = vmatpush1.xpose.msra.mxu0 0.0
    %284 = vmatprep.subr.mxu0 0.0
    %285 = vmatpush1.xpose.msra.mxu0 0.0
    %286 = vmatprep.subr.mxu0 0.0
    %287 = vmatpush1.xpose.msra.mxu0 0.0
    %288 = vmatprep.subr.mxu0 0.0
    %289 = vmatpush1.xpose.msra.mxu0 0.0
    %290 = vmatprep.subr.mxu0 0.0
    %291 = vmatpush1.xpose.msra.mxu0 0.0
    %292 = vmatprep.subr.mxu0 0.0
    %293 = vmatpush1.xpose.msra.mxu0 0.0
    %294 = vmatprep.subr.mxu0 0.0
    %295 = vmatpush1.xpose.msra.mxu0 0.0
    %296 = vmatprep.subr.mxu0 0.0
    %297 = vmatpush1.xpose.msra.mxu0 0.0
    %298 = vmatprep.subr.mxu0 0.0
    %299 = vmatpush1.xpose.msra.mxu0 0.0
    %300 = vmatprep.subr.mxu0 0.0
    %301 = vmatpush1.xpose.msra.mxu0 0.0
    %302 = vmatprep.subr.mxu0 0.0
    %303 = vmatpush1.xpose.msra.mxu0 0.0
    %304 = vmatprep.subr.mxu0 0.0
    %305 = vmatpush1.xpose.msra.mxu0 0.0
    %306 = vmatprep.subr.mxu0 0.0
    %307 = vmatpush1.xpose.msra.mxu0 0.0
    %308 = vmatprep.subr.mxu0 0.0
    %309 = vmatpush1.xpose.msra.mxu0 0.0
    %310 = vmatprep.subr.mxu0 0.0
    %311 = vmatpush1.xpose.msra.mxu0 0.0
    %312 = vmatprep.subr.mxu0 0.0
    %313 = vmatpush1.xpose.msra.mxu0 0.0
    %314 = vmatprep.subr.mxu0 0.0
    %315 = vmatpush1.xpose.msra.mxu0 0.0
    %316 = vmatprep.subr.mxu0 0.0
    %317 = vmatpush1.xpose.msra.mxu0 0.0
    %318 = vmatprep.subr.mxu0 0.0
    %319 = vmatpush1.xpose.msra.mxu0 0.0
    %320 = vmatprep.subr.mxu0 0.0
    %321 = vmatpush1.xpose.msra.mxu0 0.0
    %322 = vmatprep.subr.mxu0 0.0
    %323 = vmatpush1.xpose.msra.mxu0 0.0
    %324 = vmatprep.subr.mxu0 0.0
    %325 = vmatpush1.xpose.msra.mxu0 0.0
    %326 = vmatprep.subr.mxu0 0.0
    %327 = vmatpush1.xpose.msra.mxu0 0.0
    %328 = vmatprep.subr.mxu0 0.0
    %329 = vmatpush1.xpose.msra.mxu0 0.0
    %330 = vmatprep.subr.mxu0 0.0
    %331 = vmatpush1.xpose.msra.mxu0 0.0
    %332 = vmatprep.subr.mxu0 0.0
    %333 = vmatpush1.xpose.msra.mxu0 0.0
    %334 = vmatprep.subr.mxu0 0.0
    %335 = vmatpush1.xpose.msra.mxu0 0.0
    %336 = vmatprep.subr.mxu0 0.0
    %337 = vmatpush1.xpose.msra.mxu0 0.0
    %338 = vmatprep.subr.mxu0 0.0
    %339 = vmatpush1.xpose.msra.mxu0 0.0
    %340 = vmatprep.subr.mxu0 0.0
    %341 = vmatpush1.xpose.msra.mxu0 0.0
    %342 = vmatprep.mubr.f32.mxu0 0.0
    %343 = vmatmul.mubr.f32.gmra.mrb[0].mxu0 %v274
    %v344 = vpop.f32.mrb[0].mxu0
    %v345 = vadd.f32 0.0, %v344
    %v346 = vpop.f32.mrb[0].mxu0
    %347 = vdwg.mxu0
    %349 = vrot.lane.b32.xlu0 %v198, 96
    %v350 = vpop.permute.xlu0 %349
    %v351 = vsel %vm77, %v198, 0
    %v353 = vsel %vm77, %v350, 0
    %355 = vmatprep.subr.mxu0 0.0
    %356 = vmatpush1.xpose.msra.mxu0 %v353
    %357 = vmatprep.subr.mxu0 0.0
    %358 = vmatpush1.xpose.msra.mxu0 0.0
    %359 = vmatprep.subr.mxu0 0.0
    %360 = vmatpush1.xpose.msra.mxu0 0.0
    %361 = vmatprep.subr.mxu0 0.0
    %362 = vmatpush1.xpose.msra.mxu0 0.0
    %363 = vmatprep.subr.mxu0 0.0
    %364 = vmatpush1.xpose.msra.mxu0 0.0
    %365 = vmatprep.subr.mxu0 0.0
    %366 = vmatpush1.xpose.msra.mxu0 0.0
    %367 = vmatprep.subr.mxu0 0.0
    %368 = vmatpush1.xpose.msra.mxu0 0.0
    %369 = vmatprep.subr.mxu0 0.0
    %370 = vmatpush1.xpose.msra.mxu0 0.0
    %371 = vmatprep.subr.mxu0 0.0
    %372 = vmatpush1.xpose.msra.mxu0 0.0
    %373 = vmatprep.subr.mxu0 0.0
    %374 = vmatpush1.xpose.msra.mxu0 0.0
    %375 = vmatprep.subr.mxu0 0.0
    %376 = vmatpush1.xpose.msra.mxu0 0.0
    %377 = vmatprep.subr.mxu0 0.0
    %378 = vmatpush1.xpose.msra.mxu0 0.0
    %379 = vmatprep.subr.mxu0 0.0
    %380 = vmatpush1.xpose.msra.mxu0 0.0
    %381 = vmatprep.subr.mxu0 0.0
    %382 = vmatpush1.xpose.msra.mxu0 0.0
    %383 = vmatprep.subr.mxu0 0.0
    %384 = vmatpush1.xpose.msra.mxu0 0.0
    %385 = vmatprep.subr.mxu0 0.0
    %386 = vmatpush1.xpose.msra.mxu0 0.0
    %387 = vmatprep.subr.mxu0 0.0
    %388 = vmatpush1.xpose.msra.mxu0 0.0
    %389 = vmatprep.subr.mxu0 0.0
    %390 = vmatpush1.xpose.msra.mxu0 0.0
    %391 = vmatprep.subr.mxu0 0.0
    %392 = vmatpush1.xpose.msra.mxu0 0.0
    %393 = vmatprep.subr.mxu0 0.0
    %394 = vmatpush1.xpose.msra.mxu0 0.0
    %395 = vmatprep.subr.mxu0 0.0
    %396 = vmatpush1.xpose.msra.mxu0 0.0
    %397 = vmatprep.subr.mxu0 0.0
    %398 = vmatpush1.xpose.msra.mxu0 0.0
    %399 = vmatprep.subr.mxu0 0.0
    %400 = vmatpush1.xpose.msra.mxu0 0.0
    %401 = vmatprep.subr.mxu0 0.0
    %402 = vmatpush1.xpose.msra.mxu0 0.0
    %403 = vmatprep.subr.mxu0 0.0
    %404 = vmatpush1.xpose.msra.mxu0 0.0
    %405 = vmatprep.subr.mxu0 0.0
    %406 = vmatpush1.xpose.msra.mxu0 0.0
    %407 = vmatprep.subr.mxu0 0.0
    %408 = vmatpush1.xpose.msra.mxu0 0.0
    %409 = vmatprep.subr.mxu0 0.0
    %410 = vmatpush1.xpose.msra.mxu0 0.0
    %411 = vmatprep.subr.mxu0 0.0
    %412 = vmatpush1.xpose.msra.mxu0 0.0
    %413 = vmatprep.subr.mxu0 0.0
    %414 = vmatpush1.xpose.msra.mxu0 0.0
    %415 = vmatprep.subr.mxu0 0.0
    %416 = vmatpush1.xpose.msra.mxu0 0.0
    %417 = vmatprep.subr.mxu0 0.0
    %418 = vmatpush1.xpose.msra.mxu0 0.0
    %419 = vmatprep.mubr.f32.mxu0 0.0
    %420 = vmatmul.mubr.f32.gmra.mrb[0].mxu0 %v351
    %v421 = vpop.f32.mrb[0].mxu0
    %v422 = vadd.f32 0.0, %v421
    %v423 = vpop.f32.mrb[0].mxu0
    %424 = vdwg.mxu0
    %426 = vrot.lane.b32.xlu0 %v203, 96
    %v427 = vpop.permute.xlu0 %426
    %v428 = vsel %vm77, %v203, 0
    %v430 = vsel %vm77, %v427, 0
    %432 = vmatprep.subr.mxu0 0.0
    %433 = vmatpush1.xpose.msra.mxu0 %v430
    %434 = vmatprep.subr.mxu0 0.0
    %435 = vmatpush1.xpose.msra.mxu0 0.0
    %436 = vmatprep.subr.mxu0 0.0
    %437 = vmatpush1.xpose.msra.mxu0 0.0
    %438 = vmatprep.subr.mxu0 0.0
    %439 = vmatpush1.xpose.msra.mxu0 0.0
    %440 = vmatprep.subr.mxu0 0.0
    %441 = vmatpush1.xpose.msra.mxu0 0.0
    %442 = vmatprep.subr.mxu0 0.0
    %443 = vmatpush1.xpose.msra.mxu0 0.0
    %444 = vmatprep.subr.mxu0 0.0
    %445 = vmatpush1.xpose.msra.mxu0 0.0
    %446 = vmatprep.subr.mxu0 0.0
    %447 = vmatpush1.xpose.msra.mxu0 0.0
    %448 = vmatprep.subr.mxu0 0.0
    %449 = vmatpush1.xpose.msra.mxu0 0.0
    %450 = vmatprep.subr.mxu0 0.0
    %451 = vmatpush1.xpose.msra.mxu0 0.0
    %452 = vmatprep.subr.mxu0 0.0
    %453 = vmatpush1.xpose.msra.mxu0 0.0
    %454 = vmatprep.subr.mxu0 0.0
    %455 = vmatpush1.xpose.msra.mxu0 0.0
    %456 = vmatprep.subr.mxu0 0.0
    %457 = vmatpush1.xpose.msra.mxu0 0.0
    %458 = vmatprep.subr.mxu0 0.0
    %459 = vmatpush1.xpose.msra.mxu0 0.0
    %460 = vmatprep.subr.mxu0 0.0
    %461 = vmatpush1.xpose.msra.mxu0 0.0
    %462 = vmatprep.subr.mxu0 0.0
    %463 = vmatpush1.xpose.msra.mxu0 0.0
    %464 = vmatprep.subr.mxu0 0.0
    %465 = vmatpush1.xpose.msra.mxu0 0.0
    %466 = vmatprep.subr.mxu0 0.0
    %467 = vmatpush1.xpose.msra.mxu0 0.0
    %468 = vmatprep.subr.mxu0 0.0
    %469 = vmatpush1.xpose.msra.mxu0 0.0
    %470 = vmatprep.subr.mxu0 0.0
    %471 = vmatpush1.xpose.msra.mxu0 0.0
    %472 = vmatprep.subr.mxu0 0.0
    %473 = vmatpush1.xpose.msra.mxu0 0.0
    %474 = vmatprep.subr.mxu0 0.0
    %475 = vmatpush1.xpose.msra.mxu0 0.0
    %476 = vmatprep.subr.mxu0 0.0
    %477 = vmatpush1.xpose.msra.mxu0 0.0
    %478 = vmatprep.subr.mxu0 0.0
    %479 = vmatpush1.xpose.msra.mxu0 0.0
    %480 = vmatprep.subr.mxu0 0.0
    %481 = vmatpush1.xpose.msra.mxu0 0.0
    %482 = vmatprep.subr.mxu0 0.0
    %483 = vmatpush1.xpose.msra.mxu0 0.0
    %484 = vmatprep.subr.mxu0 0.0
    %485 = vmatpush1.xpose.msra.mxu0 0.0
    %486 = vmatprep.subr.mxu0 0.0
    %487 = vmatpush1.xpose.msra.mxu0 0.0
    %488 = vmatprep.subr.mxu0 0.0
    %489 = vmatpush1.xpose.msra.mxu0 0.0
    %490 = vmatprep.subr.mxu0 0.0
    %491 = vmatpush1.xpose.msra.mxu0 0.0
    %492 = vmatprep.subr.mxu0 0.0
    %493 = vmatpush1.xpose.msra.mxu0 0.0
    %494 = vmatprep.subr.mxu0 0.0
    %495 = vmatpush1.xpose.msra.mxu0 0.0
    %496 = vmatprep.mubr.f32.mxu0 0.0
    %497 = vmatmul.mubr.f32.gmra.mrb[0].mxu0 %v428
    %v498 = vpop.f32.mrb[0].mxu0
    %v499 = vadd.f32 0.0, %v498
    %v500 = vpop.f32.mrb[0].mxu0
    %501 = vdwg.mxu0
    %503 = vrot.lane.b32.xlu0 %v208, 96
    %v504 = vpop.permute.xlu0 %503
    %v505 = vsel %vm77, %v208, 0
    %v507 = vsel %vm77, %v504, 0
    %509 = vmatprep.subr.mxu0 0.0
    %510 = vmatpush1.xpose.msra.mxu0 %v507
    %511 = vmatprep.subr.mxu0 0.0
    %512 = vmatpush1.xpose.msra.mxu0 0.0
    %513 = vmatprep.subr.mxu0 0.0
    %514 = vmatpush1.xpose.msra.mxu0 0.0
    %515 = vmatprep.subr.mxu0 0.0
    %516 = vmatpush1.xpose.msra.mxu0 0.0
    %517 = vmatprep.subr.mxu0 0.0
    %518 = vmatpush1.xpose.msra.mxu0 0.0
    %519 = vmatprep.subr.mxu0 0.0
    %520 = vmatpush1.xpose.msra.mxu0 0.0
    %521 = vmatprep.subr.mxu0 0.0
    %522 = vmatpush1.xpose.msra.mxu0 0.0
    %523 = vmatprep.subr.mxu0 0.0
    %524 = vmatpush1.xpose.msra.mxu0 0.0
    %525 = vmatprep.subr.mxu0 0.0
    %526 = vmatpush1.xpose.msra.mxu0 0.0
    %527 = vmatprep.subr.mxu0 0.0
    %528 = vmatpush1.xpose.msra.mxu0 0.0
    %529 = vmatprep.subr.mxu0 0.0
    %530 = vmatpush1.xpose.msra.mxu0 0.0
    %531 = vmatprep.subr.mxu0 0.0
    %532 = vmatpush1.xpose.msra.mxu0 0.0
    %533 = vmatprep.subr.mxu0 0.0
    %534 = vmatpush1.xpose.msra.mxu0 0.0
    %535 = vmatprep.subr.mxu0 0.0
    %536 = vmatpush1.xpose.msra.mxu0 0.0
    %537 = vmatprep.subr.mxu0 0.0
    %538 = vmatpush1.xpose.msra.mxu0 0.0
    %539 = vmatprep.subr.mxu0 0.0
    %540 = vmatpush1.xpose.msra.mxu0 0.0
    %541 = vmatprep.subr.mxu0 0.0
    %542 = vmatpush1.xpose.msra.mxu0 0.0
    %543 = vmatprep.subr.mxu0 0.0
    %544 = vmatpush1.xpose.msra.mxu0 0.0
    %545 = vmatprep.subr.mxu0 0.0
    %546 = vmatpush1.xpose.msra.mxu0 0.0
    %547 = vmatprep.subr.mxu0 0.0
    %548 = vmatpush1.xpose.msra.mxu0 0.0
    %549 = vmatprep.subr.mxu0 0.0
    %550 = vmatpush1.xpose.msra.mxu0 0.0
    %551 = vmatprep.subr.mxu0 0.0
    %552 = vmatpush1.xpose.msra.mxu0 0.0
    %553 = vmatprep.subr.mxu0 0.0
    %554 = vmatpush1.xpose.msra.mxu0 0.0
    %555 = vmatprep.subr.mxu0 0.0
    %556 = vmatpush1.xpose.msra.mxu0 0.0
    %557 = vmatprep.subr.mxu0 0.0
    %558 = vmatpush1.xpose.msra.mxu0 0.0
    %559 = vmatprep.subr.mxu0 0.0
    %560 = vmatpush1.xpose.msra.mxu0 0.0
    %561 = vmatprep.subr.mxu0 0.0
    %562 = vmatpush1.xpose.msra.mxu0 0.0
    %563 = vmatprep.subr.mxu0 0.0
    %564 = vmatpush1.xpose.msra.mxu0 0.0
    %565 = vmatprep.subr.mxu0 0.0
    %566 = vmatpush1.xpose.msra.mxu0 0.0
    %567 = vmatprep.subr.mxu0 0.0
    %568 = vmatpush1.xpose.msra.mxu0 0.0
    %569 = vmatprep.subr.mxu0 0.0
    %570 = vmatpush1.xpose.msra.mxu0 0.0
    %571 = vmatprep.subr.mxu0 0.0
    %572 = vmatpush1.xpose.msra.mxu0 0.0
    %573 = vmatprep.mubr.f32.mxu0 0.0
    %574 = vmatmul.mubr.f32.gmra.mrb[0].mxu0 %v505
    %v575 = vpop.f32.mrb[0].mxu0
    %v576 = vadd.f32 0.0, %v575
    %v577 = vpop.f32.mrb[0].mxu0
    %578 = vdwg.mxu0
    %580 = vrot.lane.b32.xlu0 %v213, 96
    %v581 = vpop.permute.xlu0 %580
    %v582 = vsel %vm77, %v213, 0
    %v584 = vsel %vm77, %v581, 0
    %586 = vmatprep.subr.mxu0 0.0
    %587 = vmatpush1.xpose.msra.mxu0 %v584
    %588 = vmatprep.subr.mxu0 0.0
    %589 = vmatpush1.xpose.msra.mxu0 0.0
    %590 = vmatprep.subr.mxu0 0.0
    %591 = vmatpush1.xpose.msra.mxu0 0.0
    %592 = vmatprep.subr.mxu0 0.0
    %593 = vmatpush1.xpose.msra.mxu0 0.0
    %594 = vmatprep.subr.mxu0 0.0
    %595 = vmatpush1.xpose.msra.mxu0 0.0
    %596 = vmatprep.subr.mxu0 0.0
    %597 = vmatpush1.xpose.msra.mxu0 0.0
    %598 = vmatprep.subr.mxu0 0.0
    %599 = vmatpush1.xpose.msra.mxu0 0.0
    %600 = vmatprep.subr.mxu0 0.0
    %601 = vmatpush1.xpose.msra.mxu0 0.0
    %602 = vmatprep.subr.mxu0 0.0
    %603 = vmatpush1.xpose.msra.mxu0 0.0
    %604 = vmatprep.subr.mxu0 0.0
    %605 = vmatpush1.xpose.msra.mxu0 0.0
    %606 = vmatprep.subr.mxu0 0.0
    %607 = vmatpush1.xpose.msra.mxu0 0.0
    %608 = vmatprep.subr.mxu0 0.0
    %609 = vmatpush1.xpose.msra.mxu0 0.0
    %610 = vmatprep.subr.mxu0 0.0
    %611 = vmatpush1.xpose.msra.mxu0 0.0
    %612 = vmatprep.subr.mxu0 0.0
    %613 = vmatpush1.xpose.msra.mxu0 0.0
    %614 = vmatprep.subr.mxu0 0.0
    %615 = vmatpush1.xpose.msra.mxu0 0.0
    %616 = vmatprep.subr.mxu0 0.0
    %617 = vmatpush1.xpose.msra.mxu0 0.0
    %618 = vmatprep.subr.mxu0 0.0
    %619 = vmatpush1.xpose.msra.mxu0 0.0
    %620 = vmatprep.subr.mxu0 0.0
    %621 = vmatpush1.xpose.msra.mxu0 0.0
    %622 = vmatprep.subr.mxu0 0.0
    %623 = vmatpush1.xpose.msra.mxu0 0.0
    %624 = vmatprep.subr.mxu0 0.0
    %625 = vmatpush1.xpose.msra.mxu0 0.0
    %626 = vmatprep.subr.mxu0 0.0
    %627 = vmatpush1.xpose.msra.mxu0 0.0
    %628 = vmatprep.subr.mxu0 0.0
    %629 = vmatpush1.xpose.msra.mxu0 0.0
    %630 = vmatprep.subr.mxu0 0.0
    %631 = vmatpush1.xpose.msra.mxu0 0.0
    %632 = vmatprep.subr.mxu0 0.0
    %633 = vmatpush1.xpose.msra.mxu0 0.0
    %634 = vmatprep.subr.mxu0 0.0
    %635 = vmatpush1.xpose.msra.mxu0 0.0
    %636 = vmatprep.subr.mxu0 0.0
    %637 = vmatpush1.xpose.msra.mxu0 0.0
    %638 = vmatprep.subr.mxu0 0.0
    %639 = vmatpush1.xpose.msra.mxu0 0.0
    %640 = vmatprep.subr.mxu0 0.0
    %641 = vmatpush1.xpose.msra.mxu0 0.0
    %642 = vmatprep.subr.mxu0 0.0
    %643 = vmatpush1.xpose.msra.mxu0 0.0
    %644 = vmatprep.subr.mxu0 0.0
    %645 = vmatpush1.xpose.msra.mxu0 0.0
    %646 = vmatprep.subr.mxu0 0.0
    %647 = vmatpush1.xpose.msra.mxu0 0.0
    %648 = vmatprep.subr.mxu0 0.0
    %649 = vmatpush1.xpose.msra.mxu0 0.0
    %650 = vmatprep.mubr.f32.mxu0 0.0
    %651 = vmatmul.mubr.f32.gmra.mrb[0].mxu0 %v582
    %v652 = vpop.f32.mrb[0].mxu0
    %v653 = vadd.f32 0.0, %v652
    %v654 = vpop.f32.mrb[0].mxu0
    %655 = vdwg.mxu0
    %657 = vrot.lane.b32.xlu0 %v218, 96
    %v658 = vpop.permute.xlu0 %657
    %v659 = vsel %vm77, %v218, 0
    %v661 = vsel %vm77, %v658, 0
    %663 = vmatprep.subr.mxu0 0.0
    %664 = vmatpush1.xpose.msra.mxu0 %v661
    %665 = vmatprep.subr.mxu0 0.0
    %666 = vmatpush1.xpose.msra.mxu0 0.0
    %667 = vmatprep.subr.mxu0 0.0
    %668 = vmatpush1.xpose.msra.mxu0 0.0
    %669 = vmatprep.subr.mxu0 0.0
    %670 = vmatpush1.xpose.msra.mxu0 0.0
    %671 = vmatprep.subr.mxu0 0.0
    %672 = vmatpush1.xpose.msra.mxu0 0.0
    %673 = vmatprep.subr.mxu0 0.0
    %674 = vmatpush1.xpose.msra.mxu0 0.0
    %675 = vmatprep.subr.mxu0 0.0
    %676 = vmatpush1.xpose.msra.mxu0 0.0
    %677 = vmatprep.subr.mxu0 0.0
    %678 = vmatpush1.xpose.msra.mxu0 0.0
    %679 = vmatprep.subr.mxu0 0.0
    %680 = vmatpush1.xpose.msra.mxu0 0.0
    %681 = vmatprep.subr.mxu0 0.0
    %682 = vmatpush1.xpose.msra.mxu0 0.0
    %683 = vmatprep.subr.mxu0 0.0
    %684 = vmatpush1.xpose.msra.mxu0 0.0
    %685 = vmatprep.subr.mxu0 0.0
    %686 = vmatpush1.xpose.msra.mxu0 0.0
    %687 = vmatprep.subr.mxu0 0.0
    %688 = vmatpush1.xpose.msra.mxu0 0.0
    %689 = vmatprep.subr.mxu0 0.0
    %690 = vmatpush1.xpose.msra.mxu0 0.0
    %691 = vmatprep.subr.mxu0 0.0
    %692 = vmatpush1.xpose.msra.mxu0 0.0
    %693 = vmatprep.subr.mxu0 0.0
    %694 = vmatpush1.xpose.msra.mxu0 0.0
    %695 = vmatprep.subr.mxu0 0.0
    %696 = vmatpush1.xpose.msra.mxu0 0.0
    %697 = vmatprep.subr.mxu0 0.0
    %698 = vmatpush1.xpose.msra.mxu0 0.0
    %699 = vmatprep.subr.mxu0 0.0
    %700 = vmatpush1.xpose.msra.mxu0 0.0
    %701 = vmatprep.subr.mxu0 0.0
    %702 = vmatpush1.xpose.msra.mxu0 0.0
    %703 = vmatprep.subr.mxu0 0.0
    %704 = vmatpush1.xpose.msra.mxu0 0.0
    %705 = vmatprep.subr.mxu0 0.0
    %706 = vmatpush1.xpose.msra.mxu0 0.0
    %707 = vmatprep.subr.mxu0 0.0
    %708 = vmatpush1.xpose.msra.mxu0 0.0
    %709 = vmatprep.subr.mxu0 0.0
    %710 = vmatpush1.xpose.msra.mxu0 0.0
    %711 = vmatprep.subr.mxu0 0.0
    %712 = vmatpush1.xpose.msra.mxu0 0.0
    %713 = vmatprep.subr.mxu0 0.0
    %714 = vmatpush1.xpose.msra.mxu0 0.0
    %715 = vmatprep.subr.mxu0 0.0
    %716 = vmatpush1.xpose.msra.mxu0 0.0
    %717 = vmatprep.subr.mxu0 0.0
    %718 = vmatpush1.xpose.msra.mxu0 0.0
    %719 = vmatprep.subr.mxu0 0.0
    %720 = vmatpush1.xpose.msra.mxu0 0.0
    %721 = vmatprep.subr.mxu0 0.0
    %722 = vmatpush1.xpose.msra.mxu0 0.0
    %723 = vmatprep.subr.mxu0 0.0
    %724 = vmatpush1.xpose.msra.mxu0 0.0
    %725 = vmatprep.subr.mxu0 0.0
    %726 = vmatpush1.xpose.msra.mxu0 0.0
    %727 = vmatprep.mubr.f32.mxu0 0.0
    %728 = vmatmul.mubr.f32.gmra.mrb[0].mxu0 %v659
    %v729 = vpop.f32.mrb[0].mxu0
    %v730 = vadd.f32 0.0, %v729
    %v731 = vpop.f32.mrb[0].mxu0
    %732 = vdwg.mxu0
    %734 = vrot.lane.b32.xlu0 %v223, 96
    %v735 = vpop.permute.xlu0 %734
    %v736 = vsel %vm77, %v223, 0
    %v738 = vsel %vm77, %v735, 0
    %740 = vmatprep.subr.mxu0 0.0
    %741 = vmatpush1.xpose.msra.mxu0 %v738
    %742 = vmatprep.subr.mxu0 0.0
    %743 = vmatpush1.xpose.msra.mxu0 0.0
    %744 = vmatprep.subr.mxu0 0.0
    %745 = vmatpush1.xpose.msra.mxu0 0.0
    %746 = vmatprep.subr.mxu0 0.0
    %747 = vmatpush1.xpose.msra.mxu0 0.0
    %748 = vmatprep.subr.mxu0 0.0
    %749 = vmatpush1.xpose.msra.mxu0 0.0
    %750 = vmatprep.subr.mxu0 0.0
    %751 = vmatpush1.xpose.msra.mxu0 0.0
    %752 = vmatprep.subr.mxu0 0.0
    %753 = vmatpush1.xpose.msra.mxu0 0.0
    %754 = vmatprep.subr.mxu0 0.0
    %755 = vmatpush1.xpose.msra.mxu0 0.0
    %756 = vmatprep.subr.mxu0 0.0
    %757 = vmatpush1.xpose.msra.mxu0 0.0
    %758 = vmatprep.subr.mxu0 0.0
    %759 = vmatpush1.xpose.msra.mxu0 0.0
    %760 = vmatprep.subr.mxu0 0.0
    %761 = vmatpush1.xpose.msra.mxu0 0.0
    %762 = vmatprep.subr.mxu0 0.0
    %763 = vmatpush1.xpose.msra.mxu0 0.0
    %764 = vmatprep.subr.mxu0 0.0
    %765 = vmatpush1.xpose.msra.mxu0 0.0
    %766 = vmatprep.subr.mxu0 0.0
    %767 = vmatpush1.xpose.msra.mxu0 0.0
    %768 = vmatprep.subr.mxu0 0.0
    %769 = vmatpush1.xpose.msra.mxu0 0.0
    %770 = vmatprep.subr.mxu0 0.0
    %771 = vmatpush1.xpose.msra.mxu0 0.0
    %772 = vmatprep.subr.mxu0 0.0
    %773 = vmatpush1.xpose.msra.mxu0 0.0
    %774 = vmatprep.subr.mxu0 0.0
    %775 = vmatpush1.xpose.msra.mxu0 0.0
    %776 = vmatprep.subr.mxu0 0.0
    %777 = vmatpush1.xpose.msra.mxu0 0.0
    %778 = vmatprep.subr.mxu0 0.0
    %779 = vmatpush1.xpose.msra.mxu0 0.0
    %780 = vmatprep.subr.mxu0 0.0
    %781 = vmatpush1.xpose.msra.mxu0 0.0
    %782 = vmatprep.subr.mxu0 0.0
    %783 = vmatpush1.xpose.msra.mxu0 0.0
    %784 = vmatprep.subr.mxu0 0.0
    %785 = vmatpush1.xpose.msra.mxu0 0.0
    %786 = vmatprep.subr.mxu0 0.0
    %787 = vmatpush1.xpose.msra.mxu0 0.0
    %788 = vmatprep.subr.mxu0 0.0
    %789 = vmatpush1.xpose.msra.mxu0 0.0
    %790 = vmatprep.subr.mxu0 0.0
    %791 = vmatpush1.xpose.msra.mxu0 0.0
    %792 = vmatprep.subr.mxu0 0.0
    %793 = vmatpush1.xpose.msra.mxu0 0.0
    %794 = vmatprep.subr.mxu0 0.0
    %795 = vmatpush1.xpose.msra.mxu0 0.0
    %796 = vmatprep.subr.mxu0 0.0
    %797 = vmatpush1.xpose.msra.mxu0 0.0
    %798 = vmatprep.subr.mxu0 0.0
    %799 = vmatpush1.xpose.msra.mxu0 0.0
    %800 = vmatprep.subr.mxu0 0.0
    %801 = vmatpush1.xpose.msra.mxu0 0.0
    %802 = vmatprep.subr.mxu0 0.0
    %803 = vmatpush1.xpose.msra.mxu0 0.0
    %804 = vmatprep.mubr.f32.mxu0 0.0
    %805 = vmatmul.mubr.f32.gmra.mrb[0].mxu0 %v736
    %v806 = vpop.f32.mrb[0].mxu0
    %v807 = vadd.f32 0.0, %v806
    %v808 = vpop.f32.mrb[0].mxu0
    %809 = vdwg.mxu0
    %811 = vrot.lane.b32.xlu0 %v228, 96
    %v812 = vpop.permute.xlu0 %811
    %v813 = vsel %vm77, %v228, 0
    %v815 = vsel %vm77, %v812, 0
    %817 = vmatprep.subr.mxu0 0.0
    %818 = vmatpush1.xpose.msra.mxu0 %v815
    %819 = vmatprep.subr.mxu0 0.0
    %820 = vmatpush1.xpose.msra.mxu0 0.0
    %821 = vmatprep.subr.mxu0 0.0
    %822 = vmatpush1.xpose.msra.mxu0 0.0
    %823 = vmatprep.subr.mxu0 0.0
    %824 = vmatpush1.xpose.msra.mxu0 0.0
    %825 = vmatprep.subr.mxu0 0.0
    %826 = vmatpush1.xpose.msra.mxu0 0.0
    %827 = vmatprep.subr.mxu0 0.0
    %828 = vmatpush1.xpose.msra.mxu0 0.0
    %829 = vmatprep.subr.mxu0 0.0
    %830 = vmatpush1.xpose.msra.mxu0 0.0
    %831 = vmatprep.subr.mxu0 0.0
    %832 = vmatpush1.xpose.msra.mxu0 0.0
    %833 = vmatprep.subr.mxu0 0.0
    %834 = vmatpush1.xpose.msra.mxu0 0.0
    %835 = vmatprep.subr.mxu0 0.0
    %836 = vmatpush1.xpose.msra.mxu0 0.0
    %837 = vmatprep.subr.mxu0 0.0
    %838 = vmatpush1.xpose.msra.mxu0 0.0
    %839 = vmatprep.subr.mxu0 0.0
    %840 = vmatpush1.xpose.msra.mxu0 0.0
    %841 = vmatprep.subr.mxu0 0.0
    %842 = vmatpush1.xpose.msra.mxu0 0.0
    %843 = vmatprep.subr.mxu0 0.0
    %844 = vmatpush1.xpose.msra.mxu0 0.0
    %845 = vmatprep.subr.mxu0 0.0
    %846 = vmatpush1.xpose.msra.mxu0 0.0
    %847 = vmatprep.subr.mxu0 0.0
    %848 = vmatpush1.xpose.msra.mxu0 0.0
    %849 = vmatprep.subr.mxu0 0.0
    %850 = vmatpush1.xpose.msra.mxu0 0.0
    %851 = vmatprep.subr.mxu0 0.0
    %852 = vmatpush1.xpose.msra.mxu0 0.0
    %853 = vmatprep.subr.mxu0 0.0
    %854 = vmatpush1.xpose.msra.mxu0 0.0
    %855 = vmatprep.subr.mxu0 0.0
    %856 = vmatpush1.xpose.msra.mxu0 0.0
    %857 = vmatprep.subr.mxu0 0.0
    %858 = vmatpush1.xpose.msra.mxu0 0.0
    %859 = vmatprep.subr.mxu0 0.0
    %860 = vmatpush1.xpose.msra.mxu0 0.0
    %861 = vmatprep.subr.mxu0 0.0
    %862 = vmatpush1.xpose.msra.mxu0 0.0
    %863 = vmatprep.subr.mxu0 0.0
    %864 = vmatpush1.xpose.msra.mxu0 0.0
    %865 = vmatprep.subr.mxu0 0.0
    %866 = vmatpush1.xpose.msra.mxu0 0.0
    %867 = vmatprep.subr.mxu0 0.0
    %868 = vmatpush1.xpose.msra.mxu0 0.0
    %869 = vmatprep.subr.mxu0 0.0
    %870 = vmatpush1.xpose.msra.mxu0 0.0
    %871 = vmatprep.subr.mxu0 0.0
    %872 = vmatpush1.xpose.msra.mxu0 0.0
    %873 = vmatprep.subr.mxu0 0.0
    %874 = vmatpush1.xpose.msra.mxu0 0.0
    %875 = vmatprep.subr.mxu0 0.0
    %876 = vmatpush1.xpose.msra.mxu0 0.0
    %877 = vmatprep.subr.mxu0 0.0
    %878 = vmatpush1.xpose.msra.mxu0 0.0
    %879 = vmatprep.subr.mxu0 0.0
    %880 = vmatpush1.xpose.msra.mxu0 0.0
    %881 = vmatprep.mubr.f32.mxu0 0.0
    %882 = vmatmul.mubr.f32.gmra.mrb[0].mxu0 %v813
    %v883 = vpop.f32.mrb[0].mxu0
    %v884 = vadd.f32 0.0, %v883
    %v885 = vpop.f32.mrb[0].mxu0
    %886 = vdwg.mxu0
    %888 = vrot.lane.b32.xlu0 %v233, 96
    %v889 = vpop.permute.xlu0 %888
    %v890 = vsel %vm77, %v233, 0
    %v892 = vsel %vm77, %v889, 0
    %894 = vmatprep.subr.mxu0 0.0
    %895 = vmatpush1.xpose.msra.mxu0 %v892
    %896 = vmatprep.subr.mxu0 0.0
    %897 = vmatpush1.xpose.msra.mxu0 0.0
    %898 = vmatprep.subr.mxu0 0.0
    %899 = vmatpush1.xpose.msra.mxu0 0.0
    %900 = vmatprep.subr.mxu0 0.0
    %901 = vmatpush1.xpose.msra.mxu0 0.0
    %902 = vmatprep.subr.mxu0 0.0
    %903 = vmatpush1.xpose.msra.mxu0 0.0
    %904 = vmatprep.subr.mxu0 0.0
    %905 = vmatpush1.xpose.msra.mxu0 0.0
    %906 = vmatprep.subr.mxu0 0.0
    %907 = vmatpush1.xpose.msra.mxu0 0.0
    %908 = vmatprep.subr.mxu0 0.0
    %909 = vmatpush1.xpose.msra.mxu0 0.0
    %910 = vmatprep.subr.mxu0 0.0
    %911 = vmatpush1.xpose.msra.mxu0 0.0
    %912 = vmatprep.subr.mxu0 0.0
    %913 = vmatpush1.xpose.msra.mxu0 0.0
    %914 = vmatprep.subr.mxu0 0.0
    %915 = vmatpush1.xpose.msra.mxu0 0.0
    %916 = vmatprep.subr.mxu0 0.0
    %917 = vmatpush1.xpose.msra.mxu0 0.0
    %918 = vmatprep.subr.mxu0 0.0
    %919 = vmatpush1.xpose.msra.mxu0 0.0
    %920 = vmatprep.subr.mxu0 0.0
    %921 = vmatpush1.xpose.msra.mxu0 0.0
    %922 = vmatprep.subr.mxu0 0.0
    %923 = vmatpush1.xpose.msra.mxu0 0.0
    %924 = vmatprep.subr.mxu0 0.0
    %925 = vmatpush1.xpose.msra.mxu0 0.0
    %926 = vmatprep.subr.mxu0 0.0
    %927 = vmatpush1.xpose.msra.mxu0 0.0
    %928 = vmatprep.subr.mxu0 0.0
    %929 = vmatpush1.xpose.msra.mxu0 0.0
    %930 = vmatprep.subr.mxu0 0.0
    %931 = vmatpush1.xpose.msra.mxu0 0.0
    %932 = vmatprep.subr.mxu0 0.0
    %933 = vmatpush1.xpose.msra.mxu0 0.0
    %934 = vmatprep.subr.mxu0 0.0
    %935 = vmatpush1.xpose.msra.mxu0 0.0
    %936 = vmatprep.subr.mxu0 0.0
    %937 = vmatpush1.xpose.msra.mxu0 0.0
    %938 = vmatprep.subr.mxu0 0.0
    %939 = vmatpush1.xpose.msra.mxu0 0.0
    %940 = vmatprep.subr.mxu0 0.0
    %941 = vmatpush1.xpose.msra.mxu0 0.0
    %942 = vmatprep.subr.mxu0 0.0
    %943 = vmatpush1.xpose.msra.mxu0 0.0
    %944 = vmatprep.subr.mxu0 0.0
    %945 = vmatpush1.xpose.msra.mxu0 0.0
    %946 = vmatprep.subr.mxu0 0.0
    %947 = vmatpush1.xpose.msra.mxu0 0.0
    %948 = vmatprep.subr.mxu0 0.0
    %949 = vmatpush1.xpose.msra.mxu0 0.0
    %950 = vmatprep.subr.mxu0 0.0
    %951 = vmatpush1.xpose.msra.mxu0 0.0
    %952 = vmatprep.subr.mxu0 0.0
    %953 = vmatpush1.xpose.msra.mxu0 0.0
    %954 = vmatprep.subr.mxu0 0.0
    %955 = vmatpush1.xpose.msra.mxu0 0.0
    %956 = vmatprep.subr.mxu0 0.0
    %957 = vmatpush1.xpose.msra.mxu0 0.0
    %958 = vmatprep.mubr.f32.mxu0 0.0
    %959 = vmatmul.mubr.f32.gmra.mrb[0].mxu0 %v890
    %v960 = vpop.f32.mrb[0].mxu0
    %v961 = vadd.f32 0.0, %v960
    %v962 = vpop.f32.mrb[0].mxu0
    %963 = vdwg.mxu0
    %965 = vrot.lane.b32.xlu0 %v238, 96
    %v966 = vpop.permute.xlu0 %965
    %v967 = vsel %vm77, %v238, 0
    %v969 = vsel %vm77, %v966, 0
    %971 = vmatprep.subr.mxu0 0.0
    %972 = vmatpush1.xpose.msra.mxu0 %v969
    %973 = vmatprep.subr.mxu0 0.0
    %974 = vmatpush1.xpose.msra.mxu0 0.0
    %975 = vmatprep.subr.mxu0 0.0
    %976 = vmatpush1.xpose.msra.mxu0 0.0
    %977 = vmatprep.subr.mxu0 0.0
    %978 = vmatpush1.xpose.msra.mxu0 0.0
    %979 = vmatprep.subr.mxu0 0.0
    %980 = vmatpush1.xpose.msra.mxu0 0.0
    %981 = vmatprep.subr.mxu0 0.0
    %982 = vmatpush1.xpose.msra.mxu0 0.0
    %983 = vmatprep.subr.mxu0 0.0
    %984 = vmatpush1.xpose.msra.mxu0 0.0
    %985 = vmatprep.subr.mxu0 0.0
    %986 = vmatpush1.xpose.msra.mxu0 0.0
    %987 = vmatprep.subr.mxu0 0.0
    %988 = vmatpush1.xpose.msra.mxu0 0.0
    %989 = vmatprep.subr.mxu0 0.0
    %990 = vmatpush1.xpose.msra.mxu0 0.0
    %991 = vmatprep.subr.mxu0 0.0
    %992 = vmatpush1.xpose.msra.mxu0 0.0
    %993 = vmatprep.subr.mxu0 0.0
    %994 = vmatpush1.xpose.msra.mxu0 0.0
    %995 = vmatprep.subr.mxu0 0.0
    %996 = vmatpush1.xpose.msra.mxu0 0.0
    %997 = vmatprep.subr.mxu0 0.0
    %998 = vmatpush1.xpose.msra.mxu0 0.0
    %999 = vmatprep.subr.mxu0 0.0
    %1000 = vmatpush1.xpose.msra.mxu0 0.0
    %1001 = vmatprep.subr.mxu0 0.0
    %1002 = vmatpush1.xpose.msra.mxu0 0.0
    %1003 = vmatprep.subr.mxu0 0.0
    %1004 = vmatpush1.xpose.msra.mxu0 0.0
    %1005 = vmatprep.subr.mxu0 0.0
    %1006 = vmatpush1.xpose.msra.mxu0 0.0
    %1007 = vmatprep.subr.mxu0 0.0
    %1008 = vmatpush1.xpose.msra.mxu0 0.0
    %1009 = vmatprep.subr.mxu0 0.0
    %1010 = vmatpush1.xpose.msra.mxu0 0.0
    %1011 = vmatprep.subr.mxu0 0.0
    %1012 = vmatpush1.xpose.msra.mxu0 0.0
    %1013 = vmatprep.subr.mxu0 0.0
    %1014 = vmatpush1.xpose.msra.mxu0 0.0
    %1015 = vmatprep.subr.mxu0 0.0
    %1016 = vmatpush1.xpose.msra.mxu0 0.0
    %1017 = vmatprep.subr.mxu0 0.0
    %1018 = vmatpush1.xpose.msra.mxu0 0.0
    %1019 = vmatprep.subr.mxu0 0.0
    %1020 = vmatpush1.xpose.msra.mxu0 0.0
    %1021 = vmatprep.subr.mxu0 0.0
    %1022 = vmatpush1.xpose.msra.mxu0 0.0
    %1023 = vmatprep.subr.mxu0 0.0
    %1024 = vmatpush1.xpose.msra.mxu0 0.0
    %1025 = vmatprep.subr.mxu0 0.0
    %1026 = vmatpush1.xpose.msra.mxu0 0.0
    %1027 = vmatprep.subr.mxu0 0.0
    %1028 = vmatpush1.xpose.msra.mxu0 0.0
    %1029 = vmatprep.subr.mxu0 0.0
    %1030 = vmatpush1.xpose.msra.mxu0 0.0
    %1031 = vmatprep.subr.mxu0 0.0
    %1032 = vmatpush1.xpose.msra.mxu0 0.0
    %1033 = vmatprep.subr.mxu0 0.0
    %1034 = vmatpush1.xpose.msra.mxu0 0.0
    %1035 = vmatprep.mubr.f32.mxu0 0.0
    %1036 = vmatmul.mubr.f32.gmra.mrb[0].mxu0 %v967
    %v1037 = vpop.f32.mrb[0].mxu0
    %v1038 = vadd.f32 0.0, %v1037
    %v1039 = vpop.f32.mrb[0].mxu0
    %1040 = vdwg.mxu0
    %1042 = vrot.lane.b32.xlu0 %v243, 96
    %v1043 = vpop.permute.xlu0 %1042
    %v1044 = vsel %vm77, %v243, 0
    %v1046 = vsel %vm77, %v1043, 0
    %1048 = vmatprep.subr.mxu0 0.0
    %1049 = vmatpush1.xpose.msra.mxu0 %v1046
    %1050 = vmatprep.subr.mxu0 0.0
    %1051 = vmatpush1.xpose.msra.mxu0 0.0
    %1052 = vmatprep.subr.mxu0 0.0
    %1053 = vmatpush1.xpose.msra.mxu0 0.0
    %1054 = vmatprep.subr.mxu0 0.0
    %1055 = vmatpush1.xpose.msra.mxu0 0.0
    %1056 = vmatprep.subr.mxu0 0.0
    %1057 = vmatpush1.xpose.msra.mxu0 0.0
    %1058 = vmatprep.subr.mxu0 0.0
    %1059 = vmatpush1.xpose.msra.mxu0 0.0
    %1060 = vmatprep.subr.mxu0 0.0
    %1061 = vmatpush1.xpose.msra.mxu0 0.0
    %1062 = vmatprep.subr.mxu0 0.0
    %1063 = vmatpush1.xpose.msra.mxu0 0.0
    %1064 = vmatprep.subr.mxu0 0.0
    %1065 = vmatpush1.xpose.msra.mxu0 0.0
    %1066 = vmatprep.subr.mxu0 0.0
    %1067 = vmatpush1.xpose.msra.mxu0 0.0
    %1068 = vmatprep.subr.mxu0 0.0
    %1069 = vmatpush1.xpose.msra.mxu0 0.0
    %1070 = vmatprep.subr.mxu0 0.0
    %1071 = vmatpush1.xpose.msra.mxu0 0.0
    %1072 = vmatprep.subr.mxu0 0.0
    %1073 = vmatpush1.xpose.msra.mxu0 0.0
    %1074 = vmatprep.subr.mxu0 0.0
    %1075 = vmatpush1.xpose.msra.mxu0 0.0
    %1076 = vmatprep.subr.mxu0 0.0
    %1077 = vmatpush1.xpose.msra.mxu0 0.0
    %1078 = vmatprep.subr.mxu0 0.0
    %1079 = vmatpush1.xpose.msra.mxu0 0.0
    %1080 = vmatprep.subr.mxu0 0.0
    %1081 = vmatpush1.xpose.msra.mxu0 0.0
    %1082 = vmatprep.subr.mxu0 0.0
    %1083 = vmatpush1.xpose.msra.mxu0 0.0
    %1084 = vmatprep.subr.mxu0 0.0
    %1085 = vmatpush1.xpose.msra.mxu0 0.0
    %1086 = vmatprep.subr.mxu0 0.0
    %1087 = vmatpush1.xpose.msra.mxu0 0.0
    %1088 = vmatprep.subr.mxu0 0.0
    %1089 = vmatpush1.xpose.msra.mxu0 0.0
    %1090 = vmatprep.subr.mxu0 0.0
    %1091 = vmatpush1.xpose.msra.mxu0 0.0
    %1092 = vmatprep.subr.mxu0 0.0
    %1093 = vmatpush1.xpose.msra.mxu0 0.0
    %1094 = vmatprep.subr.mxu0 0.0
    %1095 = vmatpush1.xpose.msra.mxu0 0.0
    %1096 = vmatprep.subr.mxu0 0.0
    %1097 = vmatpush1.xpose.msra.mxu0 0.0
    %1098 = vmatprep.subr.mxu0 0.0
    %1099 = vmatpush1.xpose.msra.mxu0 0.0
    %1100 = vmatprep.subr.mxu0 0.0
    %1101 = vmatpush1.xpose.msra.mxu0 0.0
    %1102 = vmatprep.subr.mxu0 0.0
    %1103 = vmatpush1.xpose.msra.mxu0 0.0
    %1104 = vmatprep.subr.mxu0 0.0
    %1105 = vmatpush1.xpose.msra.mxu0 0.0
    %1106 = vmatprep.subr.mxu0 0.0
    %1107 = vmatpush1.xpose.msra.mxu0 0.0
    %1108 = vmatprep.subr.mxu0 0.0
    %1109 = vmatpush1.xpose.msra.mxu0 0.0
    %1110 = vmatprep.subr.mxu0 0.0
    %1111 = vmatpush1.xpose.msra.mxu0 0.0
    %1112 = vmatprep.mubr.f32.mxu0 0.0
    %1113 = vmatmul.mubr.f32.gmra.mrb[0].mxu0 %v1044
    %v1114 = vpop.f32.mrb[0].mxu0
    %v1115 = vadd.f32 0.0, %v1114
    %v1116 = vpop.f32.mrb[0].mxu0
    %1117 = vdwg.mxu0
    %1119 = vrot.lane.b32.xlu0 %v248, 96
    %v1120 = vpop.permute.xlu0 %1119
    %v1121 = vsel %vm77, %v248, 0
    %v1123 = vsel %vm77, %v1120, 0
    %1125 = vmatprep.subr.mxu0 0.0
    %1126 = vmatpush1.xpose.msra.mxu0 %v1123
    %1127 = vmatprep.subr.mxu0 0.0
    %1128 = vmatpush1.xpose.msra.mxu0 0.0
    %1129 = vmatprep.subr.mxu0 0.0
    %1130 = vmatpush1.xpose.msra.mxu0 0.0
    %1131 = vmatprep.subr.mxu0 0.0
    %1132 = vmatpush1.xpose.msra.mxu0 0.0
    %1133 = vmatprep.subr.mxu0 0.0
    %1134 = vmatpush1.xpose.msra.mxu0 0.0
    %1135 = vmatprep.subr.mxu0 0.0
    %1136 = vmatpush1.xpose.msra.mxu0 0.0
    %1137 = vmatprep.subr.mxu0 0.0
    %1138 = vmatpush1.xpose.msra.mxu0 0.0
    %1139 = vmatprep.subr.mxu0 0.0
    %1140 = vmatpush1.xpose.msra.mxu0 0.0
    %1141 = vmatprep.subr.mxu0 0.0
    %1142 = vmatpush1.xpose.msra.mxu0 0.0
    %1143 = vmatprep.subr.mxu0 0.0
    %1144 = vmatpush1.xpose.msra.mxu0 0.0
    %1145 = vmatprep.subr.mxu0 0.0
    %1146 = vmatpush1.xpose.msra.mxu0 0.0
    %1147 = vmatprep.subr.mxu0 0.0
    %1148 = vmatpush1.xpose.msra.mxu0 0.0
    %1149 = vmatprep.subr.mxu0 0.0
    %1150 = vmatpush1.xpose.msra.mxu0 0.0
    %1151 = vmatprep.subr.mxu0 0.0
    %1152 = vmatpush1.xpose.msra.mxu0 0.0
    %1153 = vmatprep.subr.mxu0 0.0
    %1154 = vmatpush1.xpose.msra.mxu0 0.0
    %1155 = vmatprep.subr.mxu0 0.0
    %1156 = vmatpush1.xpose.msra.mxu0 0.0
    %1157 = vmatprep.subr.mxu0 0.0
    %1158 = vmatpush1.xpose.msra.mxu0 0.0
    %1159 = vmatprep.subr.mxu0 0.0
    %1160 = vmatpush1.xpose.msra.mxu0 0.0
    %1161 = vmatprep.subr.mxu0 0.0
    %1162 = vmatpush1.xpose.msra.mxu0 0.0
    %1163 = vmatprep.subr.mxu0 0.0
    %1164 = vmatpush1.xpose.msra.mxu0 0.0
    %1165 = vmatprep.subr.mxu0 0.0
    %1166 = vmatpush1.xpose.msra.mxu0 0.0
    %1167 = vmatprep.subr.mxu0 0.0
    %1168 = vmatpush1.xpose.msra.mxu0 0.0
    %1169 = vmatprep.subr.mxu0 0.0
    %1170 = vmatpush1.xpose.msra.mxu0 0.0
    %1171 = vmatprep.subr.mxu0 0.0
    %1172 = vmatpush1.xpose.msra.mxu0 0.0
    %1173 = vmatprep.subr.mxu0 0.0
    %1174 = vmatpush1.xpose.msra.mxu0 0.0
    %1175 = vmatprep.subr.mxu0 0.0
    %1176 = vmatpush1.xpose.msra.mxu0 0.0
    %1177 = vmatprep.subr.mxu0 0.0
    %1178 = vmatpush1.xpose.msra.mxu0 0.0
    %1179 = vmatprep.subr.mxu0 0.0
    %1180 = vmatpush1.xpose.msra.mxu0 0.0
    %1181 = vmatprep.subr.mxu0 0.0
    %1182 = vmatpush1.xpose.msra.mxu0 0.0
    %1183 = vmatprep.subr.mxu0 0.0
    %1184 = vmatpush1.xpose.msra.mxu0 0.0
    %1185 = vmatprep.subr.mxu0 0.0
    %1186 = vmatpush1.xpose.msra.mxu0 0.0
    %1187 = vmatprep.subr.mxu0 0.0
    %1188 = vmatpush1.xpose.msra.mxu0 0.0
    %1189 = vmatprep.mubr.f32.mxu0 0.0
    %1190 = vmatmul.mubr.f32.gmra.mrb[0].mxu0 %v1121
    %v1191 = vpop.f32.mrb[0].mxu0
    %v1192 = vadd.f32 0.0, %v1191
    %v1193 = vpop.f32.mrb[0].mxu0
    %1194 = vdwg.mxu0
    %1196 = vrot.lane.b32.xlu0 %v253, 96
    %v1197 = vpop.permute.xlu0 %1196
    %v1198 = vsel %vm77, %v253, 0
    %v1200 = vsel %vm77, %v1197, 0
    %1202 = vmatprep.subr.mxu0 0.0
    %1203 = vmatpush1.xpose.msra.mxu0 %v1200
    %1204 = vmatprep.subr.mxu0 0.0
    %1205 = vmatpush1.xpose.msra.mxu0 0.0
    %1206 = vmatprep.subr.mxu0 0.0
    %1207 = vmatpush1.xpose.msra.mxu0 0.0
    %1208 = vmatprep.subr.mxu0 0.0
    %1209 = vmatpush1.xpose.msra.mxu0 0.0
    %1210 = vmatprep.subr.mxu0 0.0
    %1211 = vmatpush1.xpose.msra.mxu0 0.0
    %1212 = vmatprep.subr.mxu0 0.0
    %1213 = vmatpush1.xpose.msra.mxu0 0.0
    %1214 = vmatprep.subr.mxu0 0.0
    %1215 = vmatpush1.xpose.msra.mxu0 0.0
    %1216 = vmatprep.subr.mxu0 0.0
    %1217 = vmatpush1.xpose.msra.mxu0 0.0
    %1218 = vmatprep.subr.mxu0 0.0
    %1219 = vmatpush1.xpose.msra.mxu0 0.0
    %1220 = vmatprep.subr.mxu0 0.0
    %1221 = vmatpush1.xpose.msra.mxu0 0.0
    %1222 = vmatprep.subr.mxu0 0.0
    %1223 = vmatpush1.xpose.msra.mxu0 0.0
    %1224 = vmatprep.subr.mxu0 0.0
    %1225 = vmatpush1.xpose.msra.mxu0 0.0
    %1226 = vmatprep.subr.mxu0 0.0
    %1227 = vmatpush1.xpose.msra.mxu0 0.0
    %1228 = vmatprep.subr.mxu0 0.0
    %1229 = vmatpush1.xpose.msra.mxu0 0.0
    %1230 = vmatprep.subr.mxu0 0.0
    %1231 = vmatpush1.xpose.msra.mxu0 0.0
    %1232 = vmatprep.subr.mxu0 0.0
    %1233 = vmatpush1.xpose.msra.mxu0 0.0
    %1234 = vmatprep.subr.mxu0 0.0
    %1235 = vmatpush1.xpose.msra.mxu0 0.0
    %1236 = vmatprep.subr.mxu0 0.0
    %1237 = vmatpush1.xpose.msra.mxu0 0.0
    %1238 = vmatprep.subr.mxu0 0.0
    %1239 = vmatpush1.xpose.msra.mxu0 0.0
    %1240 = vmatprep.subr.mxu0 0.0
    %1241 = vmatpush1.xpose.msra.mxu0 0.0
    %1242 = vmatprep.subr.mxu0 0.0
    %1243 = vmatpush1.xpose.msra.mxu0 0.0
    %1244 = vmatprep.subr.mxu0 0.0
    %1245 = vmatpush1.xpose.msra.mxu0 0.0
    %1246 = vmatprep.subr.mxu0 0.0
    %1247 = vmatpush1.xpose.msra.mxu0 0.0
    %1248 = vmatprep.subr.mxu0 0.0
    %1249 = vmatpush1.xpose.msra.mxu0 0.0
    %1250 = vmatprep.subr.mxu0 0.0
    %1251 = vmatpush1.xpose.msra.mxu0 0.0
    %1252 = vmatprep.subr.mxu0 0.0
    %1253 = vmatpush1.xpose.msra.mxu0 0.0
    %1254 = vmatprep.subr.mxu0 0.0
    %1255 = vmatpush1.xpose.msra.mxu0 0.0
    %1256 = vmatprep.subr.mxu0 0.0
    %1257 = vmatpush1.xpose.msra.mxu0 0.0
    %1258 = vmatprep.subr.mxu0 0.0
    %1259 = vmatpush1.xpose.msra.mxu0 0.0
    %1260 = vmatprep.subr.mxu0 0.0
    %1261 = vmatpush1.xpose.msra.mxu0 0.0
    %1262 = vmatprep.subr.mxu0 0.0
    %1263 = vmatpush1.xpose.msra.mxu0 0.0
    %1264 = vmatprep.subr.mxu0 0.0
    %1265 = vmatpush1.xpose.msra.mxu0 0.0
    %1266 = vmatprep.mubr.f32.mxu0 0.0
    %1267 = vmatmul.mubr.f32.gmra.mrb[0].mxu0 %v1198
    %v1268 = vpop.f32.mrb[0].mxu0
    %v1269 = vadd.f32 0.0, %v1268
    %v1270 = vpop.f32.mrb[0].mxu0
    %1271 = vdwg.mxu0
    %1273 = vrot.lane.b32.xlu0 %v258, 96
    %v1274 = vpop.permute.xlu0 %1273
    %v1275 = vsel %vm77, %v258, 0
    %v1277 = vsel %vm77, %v1274, 0
    %1279 = vmatprep.subr.mxu0 0.0
    %1280 = vmatpush1.xpose.msra.mxu0 %v1277
    %1281 = vmatprep.subr.mxu0 0.0
    %1282 = vmatpush1.xpose.msra.mxu0 0.0
    %1283 = vmatprep.subr.mxu0 0.0
    %1284 = vmatpush1.xpose.msra.mxu0 0.0
    %1285 = vmatprep.subr.mxu0 0.0
    %1286 = vmatpush1.xpose.msra.mxu0 0.0
    %1287 = vmatprep.subr.mxu0 0.0
    %1288 = vmatpush1.xpose.msra.mxu0 0.0
    %1289 = vmatprep.subr.mxu0 0.0
    %1290 = vmatpush1.xpose.msra.mxu0 0.0
    %1291 = vmatprep.subr.mxu0 0.0
    %1292 = vmatpush1.xpose.msra.mxu0 0.0
    %1293 = vmatprep.subr.mxu0 0.0
    %1294 = vmatpush1.xpose.msra.mxu0 0.0
    %1295 = vmatprep.subr.mxu0 0.0
    %1296 = vmatpush1.xpose.msra.mxu0 0.0
    %1297 = vmatprep.subr.mxu0 0.0
    %1298 = vmatpush1.xpose.msra.mxu0 0.0
    %1299 = vmatprep.subr.mxu0 0.0
    %1300 = vmatpush1.xpose.msra.mxu0 0.0
    %1301 = vmatprep.subr.mxu0 0.0
    %1302 = vmatpush1.xpose.msra.mxu0 0.0
    %1303 = vmatprep.subr.mxu0 0.0
    %1304 = vmatpush1.xpose.msra.mxu0 0.0
    %1305 = vmatprep.subr.mxu0 0.0
    %1306 = vmatpush1.xpose.msra.mxu0 0.0
    %1307 = vmatprep.subr.mxu0 0.0
    %1308 = vmatpush1.xpose.msra.mxu0 0.0
    %1309 = vmatprep.subr.mxu0 0.0
    %1310 = vmatpush1.xpose.msra.mxu0 0.0
    %1311 = vmatprep.subr.mxu0 0.0
    %1312 = vmatpush1.xpose.msra.mxu0 0.0
    %1313 = vmatprep.subr.mxu0 0.0
    %1314 = vmatpush1.xpose.msra.mxu0 0.0
    %1315 = vmatprep.subr.mxu0 0.0
    %1316 = vmatpush1.xpose.msra.mxu0 0.0
    %1317 = vmatprep.subr.mxu0 0.0
    %1318 = vmatpush1.xpose.msra.mxu0 0.0
    %1319 = vmatprep.subr.mxu0 0.0
    %1320 = vmatpush1.xpose.msra.mxu0 0.0
    %1321 = vmatprep.subr.mxu0 0.0
    %1322 = vmatpush1.xpose.msra.mxu0 0.0
    %1323 = vmatprep.subr.mxu0 0.0
    %1324 = vmatpush1.xpose.msra.mxu0 0.0
    %1325 = vmatprep.subr.mxu0 0.0
    %1326 = vmatpush1.xpose.msra.mxu0 0.0
    %1327 = vmatprep.subr.mxu0 0.0
    %1328 = vmatpush1.xpose.msra.mxu0 0.0
    %1329 = vmatprep.subr.mxu0 0.0
    %1330 = vmatpush1.xpose.msra.mxu0 0.0
    %1331 = vmatprep.subr.mxu0 0.0
    %1332 = vmatpush1.xpose.msra.mxu0 0.0
    %1333 = vmatprep.subr.mxu0 0.0
    %1334 = vmatpush1.xpose.msra.mxu0 0.0
    %1335 = vmatprep.subr.mxu0 0.0
    %1336 = vmatpush1.xpose.msra.mxu0 0.0
    %1337 = vmatprep.subr.mxu0 0.0
    %1338 = vmatpush1.xpose.msra.mxu0 0.0
    %1339 = vmatprep.subr.mxu0 0.0
    %1340 = vmatpush1.xpose.msra.mxu0 0.0
    %1341 = vmatprep.subr.mxu0 0.0
    %1342 = vmatpush1.xpose.msra.mxu0 0.0
    %1343 = vmatprep.mubr.f32.mxu0 0.0
    %1344 = vmatmul.mubr.f32.gmra.mrb[0].mxu0 %v1275
    %v1345 = vpop.f32.mrb[0].mxu0
    %v1346 = vadd.f32 0.0, %v1345
    %v1347 = vpop.f32.mrb[0].mxu0
    %1348 = vdwg.mxu0
    %1350 = vrot.lane.b32.xlu0 %v263, 96
    %v1351 = vpop.permute.xlu0 %1350
    %v1352 = vsel %vm77, %v263, 0
    %v1354 = vsel %vm77, %v1351, 0
    %1356 = vmatprep.subr.mxu0 0.0
    %1357 = vmatpush1.xpose.msra.mxu0 %v1354
    %1358 = vmatprep.subr.mxu0 0.0
    %1359 = vmatpush1.xpose.msra.mxu0 0.0
    %1360 = vmatprep.subr.mxu0 0.0
    %1361 = vmatpush1.xpose.msra.mxu0 0.0
    %1362 = vmatprep.subr.mxu0 0.0
    %1363 = vmatpush1.xpose.msra.mxu0 0.0
    %1364 = vmatprep.subr.mxu0 0.0
    %1365 = vmatpush1.xpose.msra.mxu0 0.0
    %1366 = vmatprep.subr.mxu0 0.0
    %1367 = vmatpush1.xpose.msra.mxu0 0.0
    %1368 = vmatprep.subr.mxu0 0.0
    %1369 = vmatpush1.xpose.msra.mxu0 0.0
    %1370 = vmatprep.subr.mxu0 0.0
    %1371 = vmatpush1.xpose.msra.mxu0 0.0
    %1372 = vmatprep.subr.mxu0 0.0
    %1373 = vmatpush1.xpose.msra.mxu0 0.0
    %1374 = vmatprep.subr.mxu0 0.0
    %1375 = vmatpush1.xpose.msra.mxu0 0.0
    %1376 = vmatprep.subr.mxu0 0.0
    %1377 = vmatpush1.xpose.msra.mxu0 0.0
    %1378 = vmatprep.subr.mxu0 0.0
    %1379 = vmatpush1.xpose.msra.mxu0 0.0
    %1380 = vmatprep.subr.mxu0 0.0
    %1381 = vmatpush1.xpose.msra.mxu0 0.0
    %1382 = vmatprep.subr.mxu0 0.0
    %1383 = vmatpush1.xpose.msra.mxu0 0.0
    %1384 = vmatprep.subr.mxu0 0.0
    %1385 = vmatpush1.xpose.msra.mxu0 0.0
    %1386 = vmatprep.subr.mxu0 0.0
    %1387 = vmatpush1.xpose.msra.mxu0 0.0
    %1388 = vmatprep.subr.mxu0 0.0
    %1389 = vmatpush1.xpose.msra.mxu0 0.0
    %1390 = vmatprep.subr.mxu0 0.0
    %1391 = vmatpush1.xpose.msra.mxu0 0.0
    %1392 = vmatprep.subr.mxu0 0.0
    %1393 = vmatpush1.xpose.msra.mxu0 0.0
    %1394 = vmatprep.subr.mxu0 0.0
    %1395 = vmatpush1.xpose.msra.mxu0 0.0
    %1396 = vmatprep.subr.mxu0 0.0
    %1397 = vmatpush1.xpose.msra.mxu0 0.0
    %1398 = vmatprep.subr.mxu0 0.0
    %1399 = vmatpush1.xpose.msra.mxu0 0.0
    %1400 = vmatprep.subr.mxu0 0.0
    %1401 = vmatpush1.xpose.msra.mxu0 0.0
    %1402 = vmatprep.subr.mxu0 0.0
    %1403 = vmatpush1.xpose.msra.mxu0 0.0
    %1404 = vmatprep.subr.mxu0 0.0
    %1405 = vmatpush1.xpose.msra.mxu0 0.0
    %1406 = vmatprep.subr.mxu0 0.0
    %1407 = vmatpush1.xpose.msra.mxu0 0.0
    %1408 = vmatprep.subr.mxu0 0.0
    %1409 = vmatpush1.xpose.msra.mxu0 0.0
    %1410 = vmatprep.subr.mxu0 0.0
    %1411 = vmatpush1.xpose.msra.mxu0 0.0
    %1412 = vmatprep.subr.mxu0 0.0
    %1413 = vmatpush1.xpose.msra.mxu0 0.0
    %1414 = vmatprep.subr.mxu0 0.0
    %1415 = vmatpush1.xpose.msra.mxu0 0.0
    %1416 = vmatprep.subr.mxu0 0.0
    %1417 = vmatpush1.xpose.msra.mxu0 0.0
    %1418 = vmatprep.subr.mxu0 0.0
    %1419 = vmatpush1.xpose.msra.mxu0 0.0
    %1420 = vmatprep.mubr.f32.mxu0 0.0
    %1421 = vmatmul.mubr.f32.gmra.mrb[0].mxu0 %v1352
    %v1422 = vpop.f32.mrb[0].mxu0
    %v1423 = vadd.f32 0.0, %v1422
    %v1424 = vpop.f32.mrb[0].mxu0
    %1425 = vdwg.mxu0
    %1427 = vrot.lane.b32.xlu0 %v268, 96
    %v1428 = vpop.permute.xlu0 %1427
    %v1429 = vsel %vm77, %v268, 0
    %v1431 = vsel %vm77, %v1428, 0
    %1433 = vmatprep.subr.mxu0 0.0
    %1434 = vmatpush1.xpose.msra.mxu0 %v1431
    %1435 = vmatprep.subr.mxu0 0.0
    %1436 = vmatpush1.xpose.msra.mxu0 0.0
    %1437 = vmatprep.subr.mxu0 0.0
    %1438 = vmatpush1.xpose.msra.mxu0 0.0
    %1439 = vmatprep.subr.mxu0 0.0
    %1440 = vmatpush1.xpose.msra.mxu0 0.0
    %1441 = vmatprep.subr.mxu0 0.0
    %1442 = vmatpush1.xpose.msra.mxu0 0.0
    %1443 = vmatprep.subr.mxu0 0.0
    %1444 = vmatpush1.xpose.msra.mxu0 0.0
    %1445 = vmatprep.subr.mxu0 0.0
    %1446 = vmatpush1.xpose.msra.mxu0 0.0
    %1447 = vmatprep.subr.mxu0 0.0
    %1448 = vmatpush1.xpose.msra.mxu0 0.0
    %1449 = vmatprep.subr.mxu0 0.0
    %1450 = vmatpush1.xpose.msra.mxu0 0.0
    %1451 = vmatprep.subr.mxu0 0.0
    %1452 = vmatpush1.xpose.msra.mxu0 0.0
    %1453 = vmatprep.subr.mxu0 0.0
    %1454 = vmatpush1.xpose.msra.mxu0 0.0
    %1455 = vmatprep.subr.mxu0 0.0
    %1456 = vmatpush1.xpose.msra.mxu0 0.0
    %1457 = vmatprep.subr.mxu0 0.0
    %1458 = vmatpush1.xpose.msra.mxu0 0.0
    %1459 = vmatprep.subr.mxu0 0.0
    %1460 = vmatpush1.xpose.msra.mxu0 0.0
    %1461 = vmatprep.subr.mxu0 0.0
    %1462 = vmatpush1.xpose.msra.mxu0 0.0
    %1463 = vmatprep.subr.mxu0 0.0
    %1464 = vmatpush1.xpose.msra.mxu0 0.0
    %1465 = vmatprep.subr.mxu0 0.0
    %1466 = vmatpush1.xpose.msra.mxu0 0.0
    %1467 = vmatprep.subr.mxu0 0.0
    %1468 = vmatpush1.xpose.msra.mxu0 0.0
    %1469 = vmatprep.subr.mxu0 0.0
    %1470 = vmatpush1.xpose.msra.mxu0 0.0
    %1471 = vmatprep.subr.mxu0 0.0
    %1472 = vmatpush1.xpose.msra.mxu0 0.0
    %1473 = vmatprep.subr.mxu0 0.0
    %1474 = vmatpush1.xpose.msra.mxu0 0.0
    %1475 = vmatprep.subr.mxu0 0.0
    %1476 = vmatpush1.xpose.msra.mxu0 0.0
    %1477 = vmatprep.subr.mxu0 0.0
    %1478 = vmatpush1.xpose.msra.mxu0 0.0
    %1479 = vmatprep.subr.mxu0 0.0
    %1480 = vmatpush1.xpose.msra.mxu0 0.0
    %1481 = vmatprep.subr.mxu0 0.0
    %1482 = vmatpush1.xpose.msra.mxu0 0.0
    %1483 = vmatprep.subr.mxu0 0.0
    %1484 = vmatpush1.xpose.msra.mxu0 0.0
    %1485 = vmatprep.subr.mxu0 0.0
    %1486 = vmatpush1.xpose.msra.mxu0 0.0
    %1487 = vmatprep.subr.mxu0 0.0
    %1488 = vmatpush1.xpose.msra.mxu0 0.0
    %1489 = vmatprep.subr.mxu0 0.0
    %1490 = vmatpush1.xpose.msra.mxu0 0.0
    %1491 = vmatprep.subr.mxu0 0.0
    %1492 = vmatpush1.xpose.msra.mxu0 0.0
    %1493 = vmatprep.subr.mxu0 0.0
    %1494 = vmatpush1.xpose.msra.mxu0 0.0
    %1495 = vmatprep.subr.mxu0 0.0
    %1496 = vmatpush1.xpose.msra.mxu0 0.0
    %1497 = vmatprep.mubr.f32.mxu0 0.0
    %1498 = vmatmul.mubr.f32.gmra.mrb[0].mxu0 %v1429
    %v1499 = vpop.f32.mrb[0].mxu0
    %v1500 = vadd.f32 0.0, %v1499
    %v1501 = vpop.f32.mrb[0].mxu0
    %1502 = vdwg.mxu0
    %vm1503 = vcmask 64512
    %v1504 = vsel %vm1503, %v345, -inf
    %1505 = vmax.xlane.f32.xlu0 %v1504
    %v1506 = vpop.xlane.xlu0 %1505
    %v1507 = vsel %vm1503, %v422, -inf
    %1508 = vmax.xlane.f32.xlu0 %v1507
    %v1509 = vpop.xlane.xlu0 %1508
    %v1510 = vsel %vm1503, %v499, -inf
    %1511 = vmax.xlane.f32.xlu0 %v1510
    %v1512 = vpop.xlane.xlu0 %1511
    %v1513 = vsel %vm1503, %v576, -inf
    %1514 = vmax.xlane.f32.xlu0 %v1513
    %v1515 = vpop.xlane.xlu0 %1514
    %v1516 = vsel %vm1503, %v653, -inf
    %1517 = vmax.xlane.f32.xlu0 %v1516
    %v1518 = vpop.xlane.xlu0 %1517
    %v1519 = vsel %vm1503, %v730, -inf
    %1520 = vmax.xlane.f32.xlu0 %v1519
    %v1521 = vpop.xlane.xlu0 %1520
    %v1522 = vsel %vm1503, %v807, -inf
    %1523 = vmax.xlane.f32.xlu0 %v1522
    %v1524 = vpop.xlane.xlu0 %1523
    %v1525 = vsel %vm1503, %v884, -inf
    %1526 = vmax.xlane.f32.xlu0 %v1525
    %v1527 = vpop.xlane.xlu0 %1526
    %v1528 = vsel %vm1503, %v961, -inf
    %1529 = vmax.xlane.f32.xlu0 %v1528
    %v1530 = vpop.xlane.xlu0 %1529
    %v1531 = vsel %vm1503, %v1038, -inf
    %1532 = vmax.xlane.f32.xlu0 %v1531
    %v1533 = vpop.xlane.xlu0 %1532
    %v1534 = vsel %vm1503, %v1115, -inf
    %1535 = vmax.xlane.f32.xlu0 %v1534
    %v1536 = vpop.xlane.xlu0 %1535
    %v1537 = vsel %vm1503, %v1192, -inf
    %1538 = vmax.xlane.f32.xlu0 %v1537
    %v1539 = vpop.xlane.xlu0 %1538
    %v1540 = vsel %vm1503, %v1269, -inf
    %1541 = vmax.xlane.f32.xlu0 %v1540
    %v1542 = vpop.xlane.xlu0 %1541
    %v1543 = vsel %vm1503, %v1346, -inf
    %1544 = vmax.xlane.f32.xlu0 %v1543
    %v1545 = vpop.xlane.xlu0 %1544
    %v1546 = vsel %vm1503, %v1423, -inf
    %1547 = vmax.xlane.f32.xlu0 %v1546
    %v1548 = vpop.xlane.xlu0 %1547
    %v1549 = vsel %vm1503, %v1500, -inf
    %1550 = vmax.xlane.f32.xlu0 %v1549
    %v1551 = vpop.xlane.xlu0 %1550
    %v1552 = vsub.f32 %v345, %v1506
    %v1553 = vsub.f32 %v422, %v1509
    %v1554 = vsub.f32 %v499, %v1512
    %v1555 = vsub.f32 %v576, %v1515
    %v1556 = vsub.f32 %v653, %v1518
    %v1557 = vsub.f32 %v730, %v1521
    %v1558 = vsub.f32 %v807, %v1524
    %v1559 = vsub.f32 %v884, %v1527
    %v1560 = vsub.f32 %v961, %v1530
    %v1561 = vsub.f32 %v1038, %v1533
    %v1562 = vsub.f32 %v1115, %v1536
    %v1563 = vsub.f32 %v1192, %v1539
    %v1564 = vsub.f32 %v1269, %v1542
    %v1565 = vsub.f32 %v1346, %v1545
    %v1566 = vsub.f32 %v1423, %v1548
    %v1567 = vsub.f32 %v1500, %v1551
    %v1568 = vmul.f32 %v1552, 1.442695
    %v1569 = vpow.pop %v1568
    %v1570 = vmul.f32 %v1553, 1.442695
    %v1571 = vpow.pop %v1570
    %v1572 = vmul.f32 %v1554, 1.442695
    %v1573 = vpow.pop %v1572
    %v1574 = vmul.f32 %v1555, 1.442695
    %v1575 = vpow.pop %v1574
    %v1576 = vmul.f32 %v1556, 1.442695
    %v1577 = vpow.pop %v1576
    %v1578 = vmul.f32 %v1557, 1.442695
    %v1579 = vpow.pop %v1578
    %v1580 = vmul.f32 %v1558, 1.442695
    %v1581 = vpow.pop %v1580
    %v1582 = vmul.f32 %v1559, 1.442695
    %v1583 = vpow.pop %v1582
    %v1584 = vmul.f32 %v1560, 1.442695
    %v1585 = vpow.pop %v1584
    %v1586 = vmul.f32 %v1561, 1.442695
    %v1587 = vpow.pop %v1586
    %v1588 = vmul.f32 %v1562, 1.442695
    %v1589 = vpow.pop %v1588
    %v1590 = vmul.f32 %v1563, 1.442695
    %v1591 = vpow.pop %v1590
    %v1592 = vmul.f32 %v1564, 1.442695
    %v1593 = vpow.pop %v1592
    %v1594 = vmul.f32 %v1565, 1.442695
    %v1595 = vpow.pop %v1594
    %v1596 = vmul.f32 %v1566, 1.442695
    %v1597 = vpow.pop %v1596
    %v1598 = vmul.f32 %v1567, 1.442695
    %v1599 = vpow.pop %v1598
    %v1600 = vsel %vm1503, %v1569, 0.0
    %1601 = vadd.xlane.f32.xlu0 %v1600
    %v1602 = vpop.xlane.xlu0 %1601
    %v1603 = vsel %vm1503, %v1571, 0.0
    %1604 = vadd.xlane.f32.xlu0 %v1603
    %v1605 = vpop.xlane.xlu0 %1604
    %v1606 = vsel %vm1503, %v1573, 0.0
    %1607 = vadd.xlane.f32.xlu0 %v1606
    %v1608 = vpop.xlane.xlu0 %1607
    %v1609 = vsel %vm1503, %v1575, 0.0
    %1610 = vadd.xlane.f32.xlu0 %v1609
    %v1611 = vpop.xlane.xlu0 %1610
    %v1612 = vsel %vm1503, %v1577, 0.0
    %1613 = vadd.xlane.f32.xlu0 %v1612
    %v1614 = vpop.xlane.xlu0 %1613
    %v1615 = vsel %vm1503, %v1579, 0.0
    %1616 = vadd.xlane.f32.xlu0 %v1615
    %v1617 = vpop.xlane.xlu0 %1616
    %v1618 = vsel %vm1503, %v1581, 0.0
    %1619 = vadd.xlane.f32.xlu0 %v1618
    %v1620 = vpop.xlane.xlu0 %1619
    %v1621 = vsel %vm1503, %v1583, 0.0
    %1622 = vadd.xlane.f32.xlu0 %v1621
    %v1623 = vpop.xlane.xlu0 %1622
    %v1624 = vsel %vm1503, %v1585, 0.0
    %1625 = vadd.xlane.f32.xlu0 %v1624
    %v1626 = vpop.xlane.xlu0 %1625
    %v1627 = vsel %vm1503, %v1587, 0.0
    %1628 = vadd.xlane.f32.xlu0 %v1627
    %v1629 = vpop.xlane.xlu0 %1628
    %v1630 = vsel %vm1503, %v1589, 0.0
    %1631 = vadd.xlane.f32.xlu0 %v1630
    %v1632 = vpop.xlane.xlu0 %1631
    %v1633 = vsel %vm1503, %v1591, 0.0
    %1634 = vadd.xlane.f32.xlu0 %v1633
    %v1635 = vpop.xlane.xlu0 %1634
    %v1636 = vsel %vm1503, %v1593, 0.0
    %1637 = vadd.xlane.f32.xlu0 %v1636
    %v1638 = vpop.xlane.xlu0 %1637
    %v1639 = vsel %vm1503, %v1595, 0.0
    %1640 = vadd.xlane.f32.xlu0 %v1639
    %v1641 = vpop.xlane.xlu0 %1640
    %v1642 = vsel %vm1503, %v1597, 0.0
    %1643 = vadd.xlane.f32.xlu0 %v1642
    %v1644 = vpop.xlane.xlu0 %1643
    %v1645 = vsel %vm1503, %v1599, 0.0
    %1646 = vadd.xlane.f32.xlu0 %v1645
    %v1647 = vpop.xlane.xlu0 %1646
    %v1648 = vrcp.pop %v1602
    %v1649 = vrcp.pop %v1605
    %v1650 = vrcp.pop %v1608
    %v1651 = vrcp.pop %v1611
    %v1652 = vrcp.pop %v1614
    %v1653 = vrcp.pop %v1617
    %v1654 = vrcp.pop %v1620
    %v1655 = vrcp.pop %v1623
    %v1656 = vrcp.pop %v1626
    %v1657 = vrcp.pop %v1629
    %v1658 = vrcp.pop %v1632
    %v1659 = vrcp.pop %v1635
    %v1660 = vrcp.pop %v1638
    %v1661 = vrcp.pop %v1641
    %v1662 = vrcp.pop %v1644
    %v1663 = vrcp.pop %v1647
    %v1664 = vmul.f32 %v1569, %v1648
    %v1665 = vmul.f32 %v1571, %v1649
    %v1666 = vmul.f32 %v1573, %v1650
    %v1667 = vmul.f32 %v1575, %v1651
    %v1668 = vmul.f32 %v1577, %v1652
    %v1669 = vmul.f32 %v1579, %v1653
    %v1670 = vmul.f32 %v1581, %v1654
    %v1671 = vmul.f32 %v1583, %v1655
    %v1672 = vmul.f32 %v1585, %v1656
    %v1673 = vmul.f32 %v1587, %v1657
    %v1674 = vmul.f32 %v1589, %v1658
    %v1675 = vmul.f32 %v1591, %v1659
    %v1676 = vmul.f32 %v1593, %v1660
    %v1677 = vmul.f32 %v1595, %v1661
    %v1678 = vmul.f32 %v1597, %v1662
    %v1679 = vmul.f32 %v1599, %v1663
    %1680 = vrot.lane.b32.xlu0 %v193, 64
    %v1681 = vpop.permute.xlu0 %1680
    %v1684 = vsel %vm1503, %v1664, 0
    %1686 = vmatprep.subr.mxu0 0.0
    %1687 = vmatpush1.msra.mxu0 %v1681
    %1688 = vmatprep.subr.mxu0 0.0
    %1689 = vmatpush1.msra.mxu0 0.0
    %1690 = vmatprep.subr.mxu0 0.0
    %1691 = vmatpush1.msra.mxu0 0.0
    %1692 = vmatprep.subr.mxu0 0.0
    %1693 = vmatpush1.msra.mxu0 0.0
    %1694 = vmatprep.subr.mxu0 0.0
    %1695 = vmatpush1.msra.mxu0 0.0
    %1696 = vmatprep.subr.mxu0 0.0
    %1697 = vmatpush1.msra.mxu0 0.0
    %1698 = vmatprep.subr.mxu0 0.0
    %1699 = vmatpush1.msra.mxu0 0.0
    %1700 = vmatprep.subr.mxu0 0.0
    %1701 = vmatpush1.msra.mxu0 0.0
    %1702 = vmatprep.subr.mxu0 0.0
    %1703 = vmatpush1.msra.mxu0 0.0
    %1704 = vmatprep.subr.mxu0 0.0
    %1705 = vmatpush1.msra.mxu0 0.0
    %1706 = vmatprep.subr.mxu0 0.0
    %1707 = vmatpush1.msra.mxu0 0.0
    %1708 = vmatprep.subr.mxu0 0.0
    %1709 = vmatpush1.msra.mxu0 0.0
    %1710 = vmatprep.subr.mxu0 0.0
    %1711 = vmatpush1.msra.mxu0 0.0
    %1712 = vmatprep.subr.mxu0 0.0
    %1713 = vmatpush1.msra.mxu0 0.0
    %1714 = vmatprep.subr.mxu0 0.0
    %1715 = vmatpush1.msra.mxu0 0.0
    %1716 = vmatprep.subr.mxu0 0.0
    %1717 = vmatpush1.msra.mxu0 0.0
    %1718 = vmatprep.subr.mxu0 0.0
    %1719 = vmatpush1.msra.mxu0 0.0
    %1720 = vmatprep.subr.mxu0 0.0
    %1721 = vmatpush1.msra.mxu0 0.0
    %1722 = vmatprep.subr.mxu0 0.0
    %1723 = vmatpush1.msra.mxu0 0.0
    %1724 = vmatprep.subr.mxu0 0.0
    %1725 = vmatpush1.msra.mxu0 0.0
    %1726 = vmatprep.subr.mxu0 0.0
    %1727 = vmatpush1.msra.mxu0 0.0
    %1728 = vmatprep.subr.mxu0 0.0
    %1729 = vmatpush1.msra.mxu0 0.0
    %1730 = vmatprep.subr.mxu0 0.0
    %1731 = vmatpush1.msra.mxu0 0.0
    %1732 = vmatprep.subr.mxu0 0.0
    %1733 = vmatpush1.msra.mxu0 0.0
    %1734 = vmatprep.subr.mxu0 0.0
    %1735 = vmatpush1.msra.mxu0 0.0
    %1736 = vmatprep.subr.mxu0 0.0
    %1737 = vmatpush1.msra.mxu0 0.0
    %1738 = vmatprep.subr.mxu0 0.0
    %1739 = vmatpush1.msra.mxu0 0.0
    %1740 = vmatprep.subr.mxu0 0.0
    %1741 = vmatpush1.msra.mxu0 0.0
    %1742 = vmatprep.subr.mxu0 0.0
    %1743 = vmatpush1.msra.mxu0 0.0
    %1744 = vmatprep.subr.mxu0 0.0
    %1745 = vmatpush1.msra.mxu0 0.0
    %1746 = vmatprep.subr.mxu0 0.0
    %1747 = vmatpush1.msra.mxu0 0.0
    %1748 = vmatprep.subr.mxu0 0.0
    %1749 = vmatpush1.msra.mxu0 0.0
    %1750 = vmatprep.mubr.f32.mxu0 0.0
    %1751 = vmatmul.mubr.f32.gmra.mrb[0].mxu0 %v1684
    %v1752 = vpop.f32.mrb[0].mxu0
    %v1753 = vadd.f32 0.0, %v1752
    %v1754 = vpop.f32.mrb[0].mxu0
    %1755 = vdwg.mxu0
    %1756 = vrot.lane.b32.xlu0 %v198, 64
    %v1757 = vpop.permute.xlu0 %1756
    %v1760 = vsel %vm1503, %v1665, 0
    %1762 = vmatprep.subr.mxu0 0.0
    %1763 = vmatpush1.msra.mxu0 %v1757
    %1764 = vmatprep.subr.mxu0 0.0
    %1765 = vmatpush1.msra.mxu0 0.0
    %1766 = vmatprep.subr.mxu0 0.0
    %1767 = vmatpush1.msra.mxu0 0.0
    %1768 = vmatprep.subr.mxu0 0.0
    %1769 = vmatpush1.msra.mxu0 0.0
    %1770 = vmatprep.subr.mxu0 0.0
    %1771 = vmatpush1.msra.mxu0 0.0
    %1772 = vmatprep.subr.mxu0 0.0
    %1773 = vmatpush1.msra.mxu0 0.0
    %1774 = vmatprep.subr.mxu0 0.0
    %1775 = vmatpush1.msra.mxu0 0.0
    %1776 = vmatprep.subr.mxu0 0.0
    %1777 = vmatpush1.msra.mxu0 0.0
    %1778 = vmatprep.subr.mxu0 0.0
    %1779 = vmatpush1.msra.mxu0 0.0
    %1780 = vmatprep.subr.mxu0 0.0
    %1781 = vmatpush1.msra.mxu0 0.0
    %1782 = vmatprep.subr.mxu0 0.0
    %1783 = vmatpush1.msra.mxu0 0.0
    %1784 = vmatprep.subr.mxu0 0.0
    %1785 = vmatpush1.msra.mxu0 0.0
    %1786 = vmatprep.subr.mxu0 0.0
    %1787 = vmatpush1.msra.mxu0 0.0
    %1788 = vmatprep.subr.mxu0 0.0
    %1789 = vmatpush1.msra.mxu0 0.0
    %1790 = vmatprep.subr.mxu0 0.0
    %1791 = vmatpush1.msra.mxu0 0.0
    %1792 = vmatprep.subr.mxu0 0.0
    %1793 = vmatpush1.msra.mxu0 0.0
    %1794 = vmatprep.subr.mxu0 0.0
    %1795 = vmatpush1.msra.mxu0 0.0
    %1796 = vmatprep.subr.mxu0 0.0
    %1797 = vmatpush1.msra.mxu0 0.0
    %1798 = vmatprep.subr.mxu0 0.0
    %1799 = vmatpush1.msra.mxu0 0.0
    %1800 = vmatprep.subr.mxu0 0.0
    %1801 = vmatpush1.msra.mxu0 0.0
    %1802 = vmatprep.subr.mxu0 0.0
    %1803 = vmatpush1.msra.mxu0 0.0
    %1804 = vmatprep.subr.mxu0 0.0
    %1805 = vmatpush1.msra.mxu0 0.0
    %1806 = vmatprep.subr.mxu0 0.0
    %1807 = vmatpush1.msra.mxu0 0.0
    %1808 = vmatprep.subr.mxu0 0.0
    %1809 = vmatpush1.msra.mxu0 0.0
    %1810 = vmatprep.subr.mxu0 0.0
    %1811 = vmatpush1.msra.mxu0 0.0
    %1812 = vmatprep.subr.mxu0 0.0
    %1813 = vmatpush1.msra.mxu0 0.0
    %1814 = vmatprep.subr.mxu0 0.0
    %1815 = vmatpush1.msra.mxu0 0.0
    %1816 = vmatprep.subr.mxu0 0.0
    %1817 = vmatpush1.msra.mxu0 0.0
    %1818 = vmatprep.subr.mxu0 0.0
    %1819 = vmatpush1.msra.mxu0 0.0
    %1820 = vmatprep.subr.mxu0 0.0
    %1821 = vmatpush1.msra.mxu0 0.0
    %1822 = vmatprep.subr.mxu0 0.0
    %1823 = vmatpush1.msra.mxu0 0.0
    %1824 = vmatprep.subr.mxu0 0.0
    %1825 = vmatpush1.msra.mxu0 0.0
    %1826 = vmatprep.mubr.f32.mxu0 0.0
    %1827 = vmatmul.mubr.f32.gmra.mrb[0].mxu0 %v1760
    %v1828 = vpop.f32.mrb[0].mxu0
    %v1829 = vadd.f32 0.0, %v1828
    %v1830 = vpop.f32.mrb[0].mxu0
    %1831 = vdwg.mxu0
    %1832 = vrot.lane.b32.xlu0 %v203, 64
    %v1833 = vpop.permute.xlu0 %1832
    %v1836 = vsel %vm1503, %v1666, 0
    %1838 = vmatprep.subr.mxu0 0.0
    %1839 = vmatpush1.msra.mxu0 %v1833
    %1840 = vmatprep.subr.mxu0 0.0
    %1841 = vmatpush1.msra.mxu0 0.0
    %1842 = vmatprep.subr.mxu0 0.0
    %1843 = vmatpush1.msra.mxu0 0.0
    %1844 = vmatprep.subr.mxu0 0.0
    %1845 = vmatpush1.msra.mxu0 0.0
    %1846 = vmatprep.subr.mxu0 0.0
    %1847 = vmatpush1.msra.mxu0 0.0
    %1848 = vmatprep.subr.mxu0 0.0
    %1849 = vmatpush1.msra.mxu0 0.0
    %1850 = vmatprep.subr.mxu0 0.0
    %1851 = vmatpush1.msra.mxu0 0.0
    %1852 = vmatprep.subr.mxu0 0.0
    %1853 = vmatpush1.msra.mxu0 0.0
    %1854 = vmatprep.subr.mxu0 0.0
    %1855 = vmatpush1.msra.mxu0 0.0
    %1856 = vmatprep.subr.mxu0 0.0
    %1857 = vmatpush1.msra.mxu0 0.0
    %1858 = vmatprep.subr.mxu0 0.0
    %1859 = vmatpush1.msra.mxu0 0.0
    %1860 = vmatprep.subr.mxu0 0.0
    %1861 = vmatpush1.msra.mxu0 0.0
    %1862 = vmatprep.subr.mxu0 0.0
    %1863 = vmatpush1.msra.mxu0 0.0
    %1864 = vmatprep.subr.mxu0 0.0
    %1865 = vmatpush1.msra.mxu0 0.0
    %1866 = vmatprep.subr.mxu0 0.0
    %1867 = vmatpush1.msra.mxu0 0.0
    %1868 = vmatprep.subr.mxu0 0.0
    %1869 = vmatpush1.msra.mxu0 0.0
    %1870 = vmatprep.subr.mxu0 0.0
    %1871 = vmatpush1.msra.mxu0 0.0
    %1872 = vmatprep.subr.mxu0 0.0
    %1873 = vmatpush1.msra.mxu0 0.0
    %1874 = vmatprep.subr.mxu0 0.0
    %1875 = vmatpush1.msra.mxu0 0.0
    %1876 = vmatprep.subr.mxu0 0.0
    %1877 = vmatpush1.msra.mxu0 0.0
    %1878 = vmatprep.subr.mxu0 0.0
    %1879 = vmatpush1.msra.mxu0 0.0
    %1880 = vmatprep.subr.mxu0 0.0
    %1881 = vmatpush1.msra.mxu0 0.0
    %1882 = vmatprep.subr.mxu0 0.0
    %1883 = vmatpush1.msra.mxu0 0.0
    %1884 = vmatprep.subr.mxu0 0.0
    %1885 = vmatpush1.msra.mxu0 0.0
    %1886 = vmatprep.subr.mxu0 0.0
    %1887 = vmatpush1.msra.mxu0 0.0
    %1888 = vmatprep.subr.mxu0 0.0
    %1889 = vmatpush1.msra.mxu0 0.0
    %1890 = vmatprep.subr.mxu0 0.0
    %1891 = vmatpush1.msra.mxu0 0.0
    %1892 = vmatprep.subr.mxu0 0.0
    %1893 = vmatpush1.msra.mxu0 0.0
    %1894 = vmatprep.subr.mxu0 0.0
    %1895 = vmatpush1.msra.mxu0 0.0
    %1896 = vmatprep.subr.mxu0 0.0
    %1897 = vmatpush1.msra.mxu0 0.0
    %1898 = vmatprep.subr.mxu0 0.0
    %1899 = vmatpush1.msra.mxu0 0.0
    %1900 = vmatprep.subr.mxu0 0.0
    %1901 = vmatpush1.msra.mxu0 0.0
    %1902 = vmatprep.mubr.f32.mxu0 0.0
    %1903 = vmatmul.mubr.f32.gmra.mrb[0].mxu0 %v1836
    %v1904 = vpop.f32.mrb[0].mxu0
    %v1905 = vadd.f32 0.0, %v1904
    %v1906 = vpop.f32.mrb[0].mxu0
    %1907 = vdwg.mxu0
    %1908 = vrot.lane.b32.xlu0 %v208, 64
    %v1909 = vpop.permute.xlu0 %1908
    %v1912 = vsel %vm1503, %v1667, 0
    %1914 = vmatprep.subr.mxu0 0.0
    %1915 = vmatpush1.msra.mxu0 %v1909
    %1916 = vmatprep.subr.mxu0 0.0
    %1917 = vmatpush1.msra.mxu0 0.0
    %1918 = vmatprep.subr.mxu0 0.0
    %1919 = vmatpush1.msra.mxu0 0.0
    %1920 = vmatprep.subr.mxu0 0.0
    %1921 = vmatpush1.msra.mxu0 0.0
    %1922 = vmatprep.subr.mxu0 0.0
    %1923 = vmatpush1.msra.mxu0 0.0
    %1924 = vmatprep.subr.mxu0 0.0
    %1925 = vmatpush1.msra.mxu0 0.0
    %1926 = vmatprep.subr.mxu0 0.0
    %1927 = vmatpush1.msra.mxu0 0.0
    %1928 = vmatprep.subr.mxu0 0.0
    %1929 = vmatpush1.msra.mxu0 0.0
    %1930 = vmatprep.subr.mxu0 0.0
    %1931 = vmatpush1.msra.mxu0 0.0
    %1932 = vmatprep.subr.mxu0 0.0
    %1933 = vmatpush1.msra.mxu0 0.0
    %1934 = vmatprep.subr.mxu0 0.0
    %1935 = vmatpush1.msra.mxu0 0.0
    %1936 = vmatprep.subr.mxu0 0.0
    %1937 = vmatpush1.msra.mxu0 0.0
    %1938 = vmatprep.subr.mxu0 0.0
    %1939 = vmatpush1.msra.mxu0 0.0
    %1940 = vmatprep.subr.mxu0 0.0
    %1941 = vmatpush1.msra.mxu0 0.0
    %1942 = vmatprep.subr.mxu0 0.0
    %1943 = vmatpush1.msra.mxu0 0.0
    %1944 = vmatprep.subr.mxu0 0.0
    %1945 = vmatpush1.msra.mxu0 0.0
    %1946 = vmatprep.subr.mxu0 0.0
    %1947 = vmatpush1.msra.mxu0 0.0
    %1948 = vmatprep.subr.mxu0 0.0
    %1949 = vmatpush1.msra.mxu0 0.0
    %1950 = vmatprep.subr.mxu0 0.0
    %1951 = vmatpush1.msra.mxu0 0.0
    %1952 = vmatprep.subr.mxu0 0.0
    %1953 = vmatpush1.msra.mxu0 0.0
    %1954 = vmatprep.subr.mxu0 0.0
    %1955 = vmatpush1.msra.mxu0 0.0
    %1956 = vmatprep.subr.mxu0 0.0
    %1957 = vmatpush1.msra.mxu0 0.0
    %1958 = vmatprep.subr.mxu0 0.0
    %1959 = vmatpush1.msra.mxu0 0.0
    %1960 = vmatprep.subr.mxu0 0.0
    %1961 = vmatpush1.msra.mxu0 0.0
    %1962 = vmatprep.subr.mxu0 0.0
    %1963 = vmatpush1.msra.mxu0 0.0
    %1964 = vmatprep.subr.mxu0 0.0
    %1965 = vmatpush1.msra.mxu0 0.0
    %1966 = vmatprep.subr.mxu0 0.0
    %1967 = vmatpush1.msra.mxu0 0.0
    %1968 = vmatprep.subr.mxu0 0.0
    %1969 = vmatpush1.msra.mxu0 0.0
    %1970 = vmatprep.subr.mxu0 0.0
    %1971 = vmatpush1.msra.mxu0 0.0
    %1972 = vmatprep.subr.mxu0 0.0
    %1973 = vmatpush1.msra.mxu0 0.0
    %1974 = vmatprep.subr.mxu0 0.0
    %1975 = vmatpush1.msra.mxu0 0.0
    %1976 = vmatprep.subr.mxu0 0.0
    %1977 = vmatpush1.msra.mxu0 0.0
    %1978 = vmatprep.mubr.f32.mxu0 0.0
    %1979 = vmatmul.mubr.f32.gmra.mrb[0].mxu0 %v1912
    %v1980 = vpop.f32.mrb[0].mxu0
    %v1981 = vadd.f32 0.0, %v1980
    %v1982 = vpop.f32.mrb[0].mxu0
    %1983 = vdwg.mxu0
    %1984 = vrot.lane.b32.xlu0 %v213, 64
    %v1985 = vpop.permute.xlu0 %1984
    %v1988 = vsel %vm1503, %v1668, 0
    %1990 = vmatprep.subr.mxu0 0.0
    %1991 = vmatpush1.msra.mxu0 %v1985
    %1992 = vmatprep.subr.mxu0 0.0
    %1993 = vmatpush1.msra.mxu0 0.0
    %1994 = vmatprep.subr.mxu0 0.0
    %1995 = vmatpush1.msra.mxu0 0.0
    %1996 = vmatprep.subr.mxu0 0.0
    %1997 = vmatpush1.msra.mxu0 0.0
    %1998 = vmatprep.subr.mxu0 0.0
    %1999 = vmatpush1.msra.mxu0 0.0
    %2000 = vmatprep.subr.mxu0 0.0
    %2001 = vmatpush1.msra.mxu0 0.0
    %2002 = vmatprep.subr.mxu0 0.0
    %2003 = vmatpush1.msra.mxu0 0.0
    %2004 = vmatprep.subr.mxu0 0.0
    %2005 = vmatpush1.msra.mxu0 0.0
    %2006 = vmatprep.subr.mxu0 0.0
    %2007 = vmatpush1.msra.mxu0 0.0
    %2008 = vmatprep.subr.mxu0 0.0
    %2009 = vmatpush1.msra.mxu0 0.0
    %2010 = vmatprep.subr.mxu0 0.0
    %2011 = vmatpush1.msra.mxu0 0.0
    %2012 = vmatprep.subr.mxu0 0.0
    %2013 = vmatpush1.msra.mxu0 0.0
    %2014 = vmatprep.subr.mxu0 0.0
    %2015 = vmatpush1.msra.mxu0 0.0
    %2016 = vmatprep.subr.mxu0 0.0
    %2017 = vmatpush1.msra.mxu0 0.0
    %2018 = vmatprep.subr.mxu0 0.0
    %2019 = vmatpush1.msra.mxu0 0.0
    %2020 = vmatprep.subr.mxu0 0.0
    %2021 = vmatpush1.msra.mxu0 0.0
    %2022 = vmatprep.subr.mxu0 0.0
    %2023 = vmatpush1.msra.mxu0 0.0
    %2024 = vmatprep.subr.mxu0 0.0
    %2025 = vmatpush1.msra.mxu0 0.0
    %2026 = vmatprep.subr.mxu0 0.0
    %2027 = vmatpush1.msra.mxu0 0.0
    %2028 = vmatprep.subr.mxu0 0.0
    %2029 = vmatpush1.msra.mxu0 0.0
    %2030 = vmatprep.subr.mxu0 0.0
    %2031 = vmatpush1.msra.mxu0 0.0
    %2032 = vmatprep.subr.mxu0 0.0
    %2033 = vmatpush1.msra.mxu0 0.0
    %2034 = vmatprep.subr.mxu0 0.0
    %2035 = vmatpush1.msra.mxu0 0.0
    %2036 = vmatprep.subr.mxu0 0.0
    %2037 = vmatpush1.msra.mxu0 0.0
    %2038 = vmatprep.subr.mxu0 0.0
    %2039 = vmatpush1.msra.mxu0 0.0
    %2040 = vmatprep.subr.mxu0 0.0
    %2041 = vmatpush1.msra.mxu0 0.0
    %2042 = vmatprep.subr.mxu0 0.0
    %2043 = vmatpush1.msra.mxu0 0.0
    %2044 = vmatprep.subr.mxu0 0.0
    %2045 = vmatpush1.msra.mxu0 0.0
    %2046 = vmatprep.subr.mxu0 0.0
    %2047 = vmatpush1.msra.mxu0 0.0
    %2048 = vmatprep.subr.mxu0 0.0
    %2049 = vmatpush1.msra.mxu0 0.0
    %2050 = vmatprep.subr.mxu0 0.0
    %2051 = vmatpush1.msra.mxu0 0.0
    %2052 = vmatprep.subr.mxu0 0.0
    %2053 = vmatpush1.msra.mxu0 0.0
    %2054 = vmatprep.mubr.f32.mxu0 0.0
    %2055 = vmatmul.mubr.f32.gmra.mrb[0].mxu0 %v1988
    %v2056 = vpop.f32.mrb[0].mxu0
    %v2057 = vadd.f32 0.0, %v2056
    %v2058 = vpop.f32.mrb[0].mxu0
    %2059 = vdwg.mxu0
    %2060 = vrot.lane.b32.xlu0 %v218, 64
    %v2061 = vpop.permute.xlu0 %2060
    %v2064 = vsel %vm1503, %v1669, 0
    %2066 = vmatprep.subr.mxu0 0.0
    %2067 = vmatpush1.msra.mxu0 %v2061
    %2068 = vmatprep.subr.mxu0 0.0
    %2069 = vmatpush1.msra.mxu0 0.0
    %2070 = vmatprep.subr.mxu0 0.0
    %2071 = vmatpush1.msra.mxu0 0.0
    %2072 = vmatprep.subr.mxu0 0.0
    %2073 = vmatpush1.msra.mxu0 0.0
    %2074 = vmatprep.subr.mxu0 0.0
    %2075 = vmatpush1.msra.mxu0 0.0
    %2076 = vmatprep.subr.mxu0 0.0
    %2077 = vmatpush1.msra.mxu0 0.0
    %2078 = vmatprep.subr.mxu0 0.0
    %2079 = vmatpush1.msra.mxu0 0.0
    %2080 = vmatprep.subr.mxu0 0.0
    %2081 = vmatpush1.msra.mxu0 0.0
    %2082 = vmatprep.subr.mxu0 0.0
    %2083 = vmatpush1.msra.mxu0 0.0
    %2084 = vmatprep.subr.mxu0 0.0
    %2085 = vmatpush1.msra.mxu0 0.0
    %2086 = vmatprep.subr.mxu0 0.0
    %2087 = vmatpush1.msra.mxu0 0.0
    %2088 = vmatprep.subr.mxu0 0.0
    %2089 = vmatpush1.msra.mxu0 0.0
    %2090 = vmatprep.subr.mxu0 0.0
    %2091 = vmatpush1.msra.mxu0 0.0
    %2092 = vmatprep.subr.mxu0 0.0
    %2093 = vmatpush1.msra.mxu0 0.0
    %2094 = vmatprep.subr.mxu0 0.0
    %2095 = vmatpush1.msra.mxu0 0.0
    %2096 = vmatprep.subr.mxu0 0.0
    %2097 = vmatpush1.msra.mxu0 0.0
    %2098 = vmatprep.subr.mxu0 0.0
    %2099 = vmatpush1.msra.mxu0 0.0
    %2100 = vmatprep.subr.mxu0 0.0
    %2101 = vmatpush1.msra.mxu0 0.0
    %2102 = vmatprep.subr.mxu0 0.0
    %2103 = vmatpush1.msra.mxu0 0.0
    %2104 = vmatprep.subr.mxu0 0.0
    %2105 = vmatpush1.msra.mxu0 0.0
    %2106 = vmatprep.subr.mxu0 0.0
    %2107 = vmatpush1.msra.mxu0 0.0
    %2108 = vmatprep.subr.mxu0 0.0
    %2109 = vmatpush1.msra.mxu0 0.0
    %2110 = vmatprep.subr.mxu0 0.0
    %2111 = vmatpush1.msra.mxu0 0.0
    %2112 = vmatprep.subr.mxu0 0.0
    %2113 = vmatpush1.msra.mxu0 0.0
    %2114 = vmatprep.subr.mxu0 0.0
    %2115 = vmatpush1.msra.mxu0 0.0
    %2116 = vmatprep.subr.mxu0 0.0
    %2117 = vmatpush1.msra.mxu0 0.0
    %2118 = vmatprep.subr.mxu0 0.0
    %2119 = vmatpush1.msra.mxu0 0.0
    %2120 = vmatprep.subr.mxu0 0.0
    %2121 = vmatpush1.msra.mxu0 0.0
    %2122 = vmatprep.subr.mxu0 0.0
    %2123 = vmatpush1.msra.mxu0 0.0
    %2124 = vmatprep.subr.mxu0 0.0
    %2125 = vmatpush1.msra.mxu0 0.0
    %2126 = vmatprep.subr.mxu0 0.0
    %2127 = vmatpush1.msra.mxu0 0.0
    %2128 = vmatprep.subr.mxu0 0.0
    %2129 = vmatpush1.msra.mxu0 0.0
    %2130 = vmatprep.mubr.f32.mxu0 0.0
    %2131 = vmatmul.mubr.f32.gmra.mrb[0].mxu0 %v2064
    %v2132 = vpop.f32.mrb[0].mxu0
    %v2133 = vadd.f32 0.0, %v2132
    %v2134 = vpop.f32.mrb[0].mxu0
    %2135 = vdwg.mxu0
    %2136 = vrot.lane.b32.xlu0 %v223, 64
    %v2137 = vpop.permute.xlu0 %2136
    %v2140 = vsel %vm1503, %v1670, 0
    %2142 = vmatprep.subr.mxu0 0.0
    %2143 = vmatpush1.msra.mxu0 %v2137
    %2144 = vmatprep.subr.mxu0 0.0
    %2145 = vmatpush1.msra.mxu0 0.0
    %2146 = vmatprep.subr.mxu0 0.0
    %2147 = vmatpush1.msra.mxu0 0.0
    %2148 = vmatprep.subr.mxu0 0.0
    %2149 = vmatpush1.msra.mxu0 0.0
    %2150 = vmatprep.subr.mxu0 0.0
    %2151 = vmatpush1.msra.mxu0 0.0
    %2152 = vmatprep.subr.mxu0 0.0
    %2153 = vmatpush1.msra.mxu0 0.0
    %2154 = vmatprep.subr.mxu0 0.0
    %2155 = vmatpush1.msra.mxu0 0.0
    %2156 = vmatprep.subr.mxu0 0.0
    %2157 = vmatpush1.msra.mxu0 0.0
    %2158 = vmatprep.subr.mxu0 0.0
    %2159 = vmatpush1.msra.mxu0 0.0
    %2160 = vmatprep.subr.mxu0 0.0
    %2161 = vmatpush1.msra.mxu0 0.0
    %2162 = vmatprep.subr.mxu0 0.0
    %2163 = vmatpush1.msra.mxu0 0.0
    %2164 = vmatprep.subr.mxu0 0.0
    %2165 = vmatpush1.msra.mxu0 0.0
    %2166 = vmatprep.subr.mxu0 0.0
    %2167 = vmatpush1.msra.mxu0 0.0
    %2168 = vmatprep.subr.mxu0 0.0
    %2169 = vmatpush1.msra.mxu0 0.0
    %2170 = vmatprep.subr.mxu0 0.0
    %2171 = vmatpush1.msra.mxu0 0.0
    %2172 = vmatprep.subr.mxu0 0.0
    %2173 = vmatpush1.msra.mxu0 0.0
    %2174 = vmatprep.subr.mxu0 0.0
    %2175 = vmatpush1.msra.mxu0 0.0
    %2176 = vmatprep.subr.mxu0 0.0
    %2177 = vmatpush1.msra.mxu0 0.0
    %2178 = vmatprep.subr.mxu0 0.0
    %2179 = vmatpush1.msra.mxu0 0.0
    %2180 = vmatprep.subr.mxu0 0.0
    %2181 = vmatpush1.msra.mxu0 0.0
    %2182 = vmatprep.subr.mxu0 0.0
    %2183 = vmatpush1.msra.mxu0 0.0
    %2184 = vmatprep.subr.mxu0 0.0
    %2185 = vmatpush1.msra.mxu0 0.0
    %2186 = vmatprep.subr.mxu0 0.0
    %2187 = vmatpush1.msra.mxu0 0.0
    %2188 = vmatprep.subr.mxu0 0.0
    %2189 = vmatpush1.msra.mxu0 0.0
    %2190 = vmatprep.subr.mxu0 0.0
    %2191 = vmatpush1.msra.mxu0 0.0
    %2192 = vmatprep.subr.mxu0 0.0
    %2193 = vmatpush1.msra.mxu0 0.0
    %2194 = vmatprep.subr.mxu0 0.0
    %2195 = vmatpush1.msra.mxu0 0.0
    %2196 = vmatprep.subr.mxu0 0.0
    %2197 = vmatpush1.msra.mxu0 0.0
    %2198 = vmatprep.subr.mxu0 0.0
    %2199 = vmatpush1.msra.mxu0 0.0
    %2200 = vmatprep.subr.mxu0 0.0
    %2201 = vmatpush1.msra.mxu0 0.0
    %2202 = vmatprep.subr.mxu0 0.0
    %2203 = vmatpush1.msra.mxu0 0.0
    %2204 = vmatprep.subr.mxu0 0.0
    %2205 = vmatpush1.msra.mxu0 0.0
    %2206 = vmatprep.mubr.f32.mxu0 0.0
    %2207 = vmatmul.mubr.f32.gmra.mrb[0].mxu0 %v2140
    %v2208 = vpop.f32.mrb[0].mxu0
    %v2209 = vadd.f32 0.0, %v2208
    %v2210 = vpop.f32.mrb[0].mxu0
    %2211 = vdwg.mxu0
    %2212 = vrot.lane.b32.xlu0 %v228, 64
    %v2213 = vpop.permute.xlu0 %2212
    %v2216 = vsel %vm1503, %v1671, 0
    %2218 = vmatprep.subr.mxu0 0.0
    %2219 = vmatpush1.msra.mxu0 %v2213
    %2220 = vmatprep.subr.mxu0 0.0
    %2221 = vmatpush1.msra.mxu0 0.0
    %2222 = vmatprep.subr.mxu0 0.0
    %2223 = vmatpush1.msra.mxu0 0.0
    %2224 = vmatprep.subr.mxu0 0.0
    %2225 = vmatpush1.msra.mxu0 0.0
    %2226 = vmatprep.subr.mxu0 0.0
    %2227 = vmatpush1.msra.mxu0 0.0
    %2228 = vmatprep.subr.mxu0 0.0
    %2229 = vmatpush1.msra.mxu0 0.0
    %2230 = vmatprep.subr.mxu0 0.0
    %2231 = vmatpush1.msra.mxu0 0.0
    %2232 = vmatprep.subr.mxu0 0.0
    %2233 = vmatpush1.msra.mxu0 0.0
    %2234 = vmatprep.subr.mxu0 0.0
    %2235 = vmatpush1.msra.mxu0 0.0
    %2236 = vmatprep.subr.mxu0 0.0
    %2237 = vmatpush1.msra.mxu0 0.0
    %2238 = vmatprep.subr.mxu0 0.0
    %2239 = vmatpush1.msra.mxu0 0.0
    %2240 = vmatprep.subr.mxu0 0.0
    %2241 = vmatpush1.msra.mxu0 0.0
    %2242 = vmatprep.subr.mxu0 0.0
    %2243 = vmatpush1.msra.mxu0 0.0
    %2244 = vmatprep.subr.mxu0 0.0
    %2245 = vmatpush1.msra.mxu0 0.0
    %2246 = vmatprep.subr.mxu0 0.0
    %2247 = vmatpush1.msra.mxu0 0.0
    %2248 = vmatprep.subr.mxu0 0.0
    %2249 = vmatpush1.msra.mxu0 0.0
    %2250 = vmatprep.subr.mxu0 0.0
    %2251 = vmatpush1.msra.mxu0 0.0
    %2252 = vmatprep.subr.mxu0 0.0
    %2253 = vmatpush1.msra.mxu0 0.0
    %2254 = vmatprep.subr.mxu0 0.0
    %2255 = vmatpush1.msra.mxu0 0.0
    %2256 = vmatprep.subr.mxu0 0.0
    %2257 = vmatpush1.msra.mxu0 0.0
    %2258 = vmatprep.subr.mxu0 0.0
    %2259 = vmatpush1.msra.mxu0 0.0
    %2260 = vmatprep.subr.mxu0 0.0
    %2261 = vmatpush1.msra.mxu0 0.0
    %2262 = vmatprep.subr.mxu0 0.0
    %2263 = vmatpush1.msra.mxu0 0.0
    %2264 = vmatprep.subr.mxu0 0.0
    %2265 = vmatpush1.msra.mxu0 0.0
    %2266 = vmatprep.subr.mxu0 0.0
    %2267 = vmatpush1.msra.mxu0 0.0
    %2268 = vmatprep.subr.mxu0 0.0
    %2269 = vmatpush1.msra.mxu0 0.0
    %2270 = vmatprep.subr.mxu0 0.0
    %2271 = vmatpush1.msra.mxu0 0.0
    %2272 = vmatprep.subr.mxu0 0.0
    %2273 = vmatpush1.msra.mxu0 0.0
    %2274 = vmatprep.subr.mxu0 0.0
    %2275 = vmatpush1.msra.mxu0 0.0
    %2276 = vmatprep.subr.mxu0 0.0
    %2277 = vmatpush1.msra.mxu0 0.0
    %2278 = vmatprep.subr.mxu0 0.0
    %2279 = vmatpush1.msra.mxu0 0.0
    %2280 = vmatprep.subr.mxu0 0.0
    %2281 = vmatpush1.msra.mxu0 0.0
    %2282 = vmatprep.mubr.f32.mxu0 0.0
    %2283 = vmatmul.mubr.f32.gmra.mrb[0].mxu0 %v2216
    %v2284 = vpop.f32.mrb[0].mxu0
    %v2285 = vadd.f32 0.0, %v2284
    %v2286 = vpop.f32.mrb[0].mxu0
    %2287 = vdwg.mxu0
    %2288 = vrot.lane.b32.xlu0 %v233, 64
    %v2289 = vpop.permute.xlu0 %2288
    %v2292 = vsel %vm1503, %v1672, 0
    %2294 = vmatprep.subr.mxu0 0.0
    %2295 = vmatpush1.msra.mxu0 %v2289
    %2296 = vmatprep.subr.mxu0 0.0
    %2297 = vmatpush1.msra.mxu0 0.0
    %2298 = vmatprep.subr.mxu0 0.0
    %2299 = vmatpush1.msra.mxu0 0.0
    %2300 = vmatprep.subr.mxu0 0.0
    %2301 = vmatpush1.msra.mxu0 0.0
    %2302 = vmatprep.subr.mxu0 0.0
    %2303 = vmatpush1.msra.mxu0 0.0
    %2304 = vmatprep.subr.mxu0 0.0
    %2305 = vmatpush1.msra.mxu0 0.0
    %2306 = vmatprep.subr.mxu0 0.0
    %2307 = vmatpush1.msra.mxu0 0.0
    %2308 = vmatprep.subr.mxu0 0.0
    %2309 = vmatpush1.msra.mxu0 0.0
    %2310 = vmatprep.subr.mxu0 0.0
    %2311 = vmatpush1.msra.mxu0 0.0
    %2312 = vmatprep.subr.mxu0 0.0
    %2313 = vmatpush1.msra.mxu0 0.0
    %2314 = vmatprep.subr.mxu0 0.0
    %2315 = vmatpush1.msra.mxu0 0.0
    %2316 = vmatprep.subr.mxu0 0.0
    %2317 = vmatpush1.msra.mxu0 0.0
    %2318 = vmatprep.subr.mxu0 0.0
    %2319 = vmatpush1.msra.mxu0 0.0
    %2320 = vmatprep.subr.mxu0 0.0
    %2321 = vmatpush1.msra.mxu0 0.0
    %2322 = vmatprep.subr.mxu0 0.0
    %2323 = vmatpush1.msra.mxu0 0.0
    %2324 = vmatprep.subr.mxu0 0.0
    %2325 = vmatpush1.msra.mxu0 0.0
    %2326 = vmatprep.subr.mxu0 0.0
    %2327 = vmatpush1.msra.mxu0 0.0
    %2328 = vmatprep.subr.mxu0 0.0
    %2329 = vmatpush1.msra.mxu0 0.0
    %2330 = vmatprep.subr.mxu0 0.0
    %2331 = vmatpush1.msra.mxu0 0.0
    %2332 = vmatprep.subr.mxu0 0.0
    %2333 = vmatpush1.msra.mxu0 0.0
    %2334 = vmatprep.subr.mxu0 0.0
    %2335 = vmatpush1.msra.mxu0 0.0
    %2336 = vmatprep.subr.mxu0 0.0
    %2337 = vmatpush1.msra.mxu0 0.0
    %2338 = vmatprep.subr.mxu0 0.0
    %2339 = vmatpush1.msra.mxu0 0.0
    %2340 = vmatprep.subr.mxu0 0.0
    %2341 = vmatpush1.msra.mxu0 0.0
    %2342 = vmatprep.subr.mxu0 0.0
    %2343 = vmatpush1.msra.mxu0 0.0
    %2344 = vmatprep.subr.mxu0 0.0
    %2345 = vmatpush1.msra.mxu0 0.0
    %2346 = vmatprep.subr.mxu0 0.0
    %2347 = vmatpush1.msra.mxu0 0.0
    %2348 = vmatprep.subr.mxu0 0.0
    %2349 = vmatpush1.msra.mxu0 0.0
    %2350 = vmatprep.subr.mxu0 0.0
    %2351 = vmatpush1.msra.mxu0 0.0
    %2352 = vmatprep.subr.mxu0 0.0
    %2353 = vmatpush1.msra.mxu0 0.0
    %2354 = vmatprep.subr.mxu0 0.0
    %2355 = vmatpush1.msra.mxu0 0.0
    %2356 = vmatprep.subr.mxu0 0.0
    %2357 = vmatpush1.msra.mxu0 0.0
    %2358 = vmatprep.mubr.f32.mxu0 0.0
    %2359 = vmatmul.mubr.f32.gmra.mrb[0].mxu0 %v2292
    %v2360 = vpop.f32.mrb[0].mxu0
    %v2361 = vadd.f32 0.0, %v2360
    %v2362 = vpop.f32.mrb[0].mxu0
    %2363 = vdwg.mxu0
    %2364 = vrot.lane.b32.xlu0 %v238, 64
    %v2365 = vpop.permute.xlu0 %2364
    %v2368 = vsel %vm1503, %v1673, 0
    %2370 = vmatprep.subr.mxu0 0.0
    %2371 = vmatpush1.msra.mxu0 %v2365
    %2372 = vmatprep.subr.mxu0 0.0
    %2373 = vmatpush1.msra.mxu0 0.0
    %2374 = vmatprep.subr.mxu0 0.0
    %2375 = vmatpush1.msra.mxu0 0.0
    %2376 = vmatprep.subr.mxu0 0.0
    %2377 = vmatpush1.msra.mxu0 0.0
    %2378 = vmatprep.subr.mxu0 0.0
    %2379 = vmatpush1.msra.mxu0 0.0
    %2380 = vmatprep.subr.mxu0 0.0
    %2381 = vmatpush1.msra.mxu0 0.0
    %2382 = vmatprep.subr.mxu0 0.0
    %2383 = vmatpush1.msra.mxu0 0.0
    %2384 = vmatprep.subr.mxu0 0.0
    %2385 = vmatpush1.msra.mxu0 0.0
    %2386 = vmatprep.subr.mxu0 0.0
    %2387 = vmatpush1.msra.mxu0 0.0
    %2388 = vmatprep.subr.mxu0 0.0
    %2389 = vmatpush1.msra.mxu0 0.0
    %2390 = vmatprep.subr.mxu0 0.0
    %2391 = vmatpush1.msra.mxu0 0.0
    %2392 = vmatprep.subr.mxu0 0.0
    %2393 = vmatpush1.msra.mxu0 0.0
    %2394 = vmatprep.subr.mxu0 0.0
    %2395 = vmatpush1.msra.mxu0 0.0
    %2396 = vmatprep.subr.mxu0 0.0
    %2397 = vmatpush1.msra.mxu0 0.0
    %2398 = vmatprep.subr.mxu0 0.0
    %2399 = vmatpush1.msra.mxu0 0.0
    %2400 = vmatprep.subr.mxu0 0.0
    %2401 = vmatpush1.msra.mxu0 0.0
    %2402 = vmatprep.subr.mxu0 0.0
    %2403 = vmatpush1.msra.mxu0 0.0
    %2404 = vmatprep.subr.mxu0 0.0
    %2405 = vmatpush1.msra.mxu0 0.0
    %2406 = vmatprep.subr.mxu0 0.0
    %2407 = vmatpush1.msra.mxu0 0.0
    %2408 = vmatprep.subr.mxu0 0.0
    %2409 = vmatpush1.msra.mxu0 0.0
    %2410 = vmatprep.subr.mxu0 0.0
    %2411 = vmatpush1.msra.mxu0 0.0
    %2412 = vmatprep.subr.mxu0 0.0
    %2413 = vmatpush1.msra.mxu0 0.0
    %2414 = vmatprep.subr.mxu0 0.0
    %2415 = vmatpush1.msra.mxu0 0.0
    %2416 = vmatprep.subr.mxu0 0.0
    %2417 = vmatpush1.msra.mxu0 0.0
    %2418 = vmatprep.subr.mxu0 0.0
    %2419 = vmatpush1.msra.mxu0 0.0
    %2420 = vmatprep.subr.mxu0 0.0
    %2421 = vmatpush1.msra.mxu0 0.0
    %2422 = vmatprep.subr.mxu0 0.0
    %2423 = vmatpush1.msra.mxu0 0.0
    %2424 = vmatprep.subr.mxu0 0.0
    %2425 = vmatpush1.msra.mxu0 0.0
    %2426 = vmatprep.subr.mxu0 0.0
    %2427 = vmatpush1.msra.mxu0 0.0
    %2428 = vmatprep.subr.mxu0 0.0
    %2429 = vmatpush1.msra.mxu0 0.0
    %2430 = vmatprep.subr.mxu0 0.0
    %2431 = vmatpush1.msra.mxu0 0.0
    %2432 = vmatprep.subr.mxu0 0.0
    %2433 = vmatpush1.msra.mxu0 0.0
    %2434 = vmatprep.mubr.f32.mxu0 0.0
    %2435 = vmatmul.mubr.f32.gmra.mrb[0].mxu0 %v2368
    %v2436 = vpop.f32.mrb[0].mxu0
    %v2437 = vadd.f32 0.0, %v2436
    %v2438 = vpop.f32.mrb[0].mxu0
    %2439 = vdwg.mxu0
    %2440 = vrot.lane.b32.xlu0 %v243, 64
    %v2441 = vpop.permute.xlu0 %2440
    %v2444 = vsel %vm1503, %v1674, 0
    %2446 = vmatprep.subr.mxu0 0.0
    %2447 = vmatpush1.msra.mxu0 %v2441
    %2448 = vmatprep.subr.mxu0 0.0
    %2449 = vmatpush1.msra.mxu0 0.0
    %2450 = vmatprep.subr.mxu0 0.0
    %2451 = vmatpush1.msra.mxu0 0.0
    %2452 = vmatprep.subr.mxu0 0.0
    %2453 = vmatpush1.msra.mxu0 0.0
    %2454 = vmatprep.subr.mxu0 0.0
    %2455 = vmatpush1.msra.mxu0 0.0
    %2456 = vmatprep.subr.mxu0 0.0
    %2457 = vmatpush1.msra.mxu0 0.0
    %2458 = vmatprep.subr.mxu0 0.0
    %2459 = vmatpush1.msra.mxu0 0.0
    %2460 = vmatprep.subr.mxu0 0.0
    %2461 = vmatpush1.msra.mxu0 0.0
    %2462 = vmatprep.subr.mxu0 0.0
    %2463 = vmatpush1.msra.mxu0 0.0
    %2464 = vmatprep.subr.mxu0 0.0
    %2465 = vmatpush1.msra.mxu0 0.0
    %2466 = vmatprep.subr.mxu0 0.0
    %2467 = vmatpush1.msra.mxu0 0.0
    %2468 = vmatprep.subr.mxu0 0.0
    %2469 = vmatpush1.msra.mxu0 0.0
    %2470 = vmatprep.subr.mxu0 0.0
    %2471 = vmatpush1.msra.mxu0 0.0
    %2472 = vmatprep.subr.mxu0 0.0
    %2473 = vmatpush1.msra.mxu0 0.0
    %2474 = vmatprep.subr.mxu0 0.0
    %2475 = vmatpush1.msra.mxu0 0.0
    %2476 = vmatprep.subr.mxu0 0.0
    %2477 = vmatpush1.msra.mxu0 0.0
    %2478 = vmatprep.subr.mxu0 0.0
    %2479 = vmatpush1.msra.mxu0 0.0
    %2480 = vmatprep.subr.mxu0 0.0
    %2481 = vmatpush1.msra.mxu0 0.0
    %2482 = vmatprep.subr.mxu0 0.0
    %2483 = vmatpush1.msra.mxu0 0.0
    %2484 = vmatprep.subr.mxu0 0.0
    %2485 = vmatpush1.msra.mxu0 0.0
    %2486 = vmatprep.subr.mxu0 0.0
    %2487 = vmatpush1.msra.mxu0 0.0
    %2488 = vmatprep.subr.mxu0 0.0
    %2489 = vmatpush1.msra.mxu0 0.0
    %2490 = vmatprep.subr.mxu0 0.0
    %2491 = vmatpush1.msra.mxu0 0.0
    %2492 = vmatprep.subr.mxu0 0.0
    %2493 = vmatpush1.msra.mxu0 0.0
    %2494 = vmatprep.subr.mxu0 0.0
    %2495 = vmatpush1.msra.mxu0 0.0
    %2496 = vmatprep.subr.mxu0 0.0
    %2497 = vmatpush1.msra.mxu0 0.0
    %2498 = vmatprep.subr.mxu0 0.0
    %2499 = vmatpush1.msra.mxu0 0.0
    %2500 = vmatprep.subr.mxu0 0.0
    %2501 = vmatpush1.msra.mxu0 0.0
    %2502 = vmatprep.subr.mxu0 0.0
    %2503 = vmatpush1.msra.mxu0 0.0
    %2504 = vmatprep.subr.mxu0 0.0
    %2505 = vmatpush1.msra.mxu0 0.0
    %2506 = vmatprep.subr.mxu0 0.0
    %2507 = vmatpush1.msra.mxu0 0.0
    %2508 = vmatprep.subr.mxu0 0.0
    %2509 = vmatpush1.msra.mxu0 0.0
    %2510 = vmatprep.mubr.f32.mxu0 0.0
    %2511 = vmatmul.mubr.f32.gmra.mrb[0].mxu0 %v2444
    %v2512 = vpop.f32.mrb[0].mxu0
    %v2513 = vadd.f32 0.0, %v2512
    %v2514 = vpop.f32.mrb[0].mxu0
    %2515 = vdwg.mxu0
    %2516 = vrot.lane.b32.xlu0 %v248, 64
    %v2517 = vpop.permute.xlu0 %2516
    %v2520 = vsel %vm1503, %v1675, 0
    %2522 = vmatprep.subr.mxu0 0.0
    %2523 = vmatpush1.msra.mxu0 %v2517
    %2524 = vmatprep.subr.mxu0 0.0
    %2525 = vmatpush1.msra.mxu0 0.0
    %2526 = vmatprep.subr.mxu0 0.0
    %2527 = vmatpush1.msra.mxu0 0.0
    %2528 = vmatprep.subr.mxu0 0.0
    %2529 = vmatpush1.msra.mxu0 0.0
    %2530 = vmatprep.subr.mxu0 0.0
    %2531 = vmatpush1.msra.mxu0 0.0
    %2532 = vmatprep.subr.mxu0 0.0
    %2533 = vmatpush1.msra.mxu0 0.0
    %2534 = vmatprep.subr.mxu0 0.0
    %2535 = vmatpush1.msra.mxu0 0.0
    %2536 = vmatprep.subr.mxu0 0.0
    %2537 = vmatpush1.msra.mxu0 0.0
    %2538 = vmatprep.subr.mxu0 0.0
    %2539 = vmatpush1.msra.mxu0 0.0
    %2540 = vmatprep.subr.mxu0 0.0
    %2541 = vmatpush1.msra.mxu0 0.0
    %2542 = vmatprep.subr.mxu0 0.0
    %2543 = vmatpush1.msra.mxu0 0.0
    %2544 = vmatprep.subr.mxu0 0.0
    %2545 = vmatpush1.msra.mxu0 0.0
    %2546 = vmatprep.subr.mxu0 0.0
    %2547 = vmatpush1.msra.mxu0 0.0
    %2548 = vmatprep.subr.mxu0 0.0
    %2549 = vmatpush1.msra.mxu0 0.0
    %2550 = vmatprep.subr.mxu0 0.0
    %2551 = vmatpush1.msra.mxu0 0.0
    %2552 = vmatprep.subr.mxu0 0.0
    %2553 = vmatpush1.msra.mxu0 0.0
    %2554 = vmatprep.subr.mxu0 0.0
    %2555 = vmatpush1.msra.mxu0 0.0
    %2556 = vmatprep.subr.mxu0 0.0
    %2557 = vmatpush1.msra.mxu0 0.0
    %2558 = vmatprep.subr.mxu0 0.0
    %2559 = vmatpush1.msra.mxu0 0.0
    %2560 = vmatprep.subr.mxu0 0.0
    %2561 = vmatpush1.msra.mxu0 0.0
    %2562 = vmatprep.subr.mxu0 0.0
    %2563 = vmatpush1.msra.mxu0 0.0
    %2564 = vmatprep.subr.mxu0 0.0
    %2565 = vmatpush1.msra.mxu0 0.0
    %2566 = vmatprep.subr.mxu0 0.0
    %2567 = vmatpush1.msra.mxu0 0.0
    %2568 = vmatprep.subr.mxu0 0.0
    %2569 = vmatpush1.msra.mxu0 0.0
    %2570 = vmatprep.subr.mxu0 0.0
    %2571 = vmatpush1.msra.mxu0 0.0
    %2572 = vmatprep.subr.mxu0 0.0
    %2573 = vmatpush1.msra.mxu0 0.0
    %2574 = vmatprep.subr.mxu0 0.0
    %2575 = vmatpush1.msra.mxu0 0.0
    %2576 = vmatprep.subr.mxu0 0.0
    %2577 = vmatpush1.msra.mxu0 0.0
    %2578 = vmatprep.subr.mxu0 0.0
    %2579 = vmatpush1.msra.mxu0 0.0
    %2580 = vmatprep.subr.mxu0 0.0
    %2581 = vmatpush1.msra.mxu0 0.0
    %2582 = vmatprep.subr.mxu0 0.0
    %2583 = vmatpush1.msra.mxu0 0.0
    %2584 = vmatprep.subr.mxu0 0.0
    %2585 = vmatpush1.msra.mxu0 0.0
    %2586 = vmatprep.mubr.f32.mxu0 0.0
    %2587 = vmatmul.mubr.f32.gmra.mrb[0].mxu0 %v2520
    %v2588 = vpop.f32.mrb[0].mxu0
    %v2589 = vadd.f32 0.0, %v2588
    %v2590 = vpop.f32.mrb[0].mxu0
    %2591 = vdwg.mxu0
    %2592 = vrot.lane.b32.xlu0 %v253, 64
    %v2593 = vpop.permute.xlu0 %2592
    %v2596 = vsel %vm1503, %v1676, 0
    %2598 = vmatprep.subr.mxu0 0.0
    %2599 = vmatpush1.msra.mxu0 %v2593
    %2600 = vmatprep.subr.mxu0 0.0
    %2601 = vmatpush1.msra.mxu0 0.0
    %2602 = vmatprep.subr.mxu0 0.0
    %2603 = vmatpush1.msra.mxu0 0.0
    %2604 = vmatprep.subr.mxu0 0.0
    %2605 = vmatpush1.msra.mxu0 0.0
    %2606 = vmatprep.subr.mxu0 0.0
    %2607 = vmatpush1.msra.mxu0 0.0
    %2608 = vmatprep.subr.mxu0 0.0
    %2609 = vmatpush1.msra.mxu0 0.0
    %2610 = vmatprep.subr.mxu0 0.0
    %2611 = vmatpush1.msra.mxu0 0.0
    %2612 = vmatprep.subr.mxu0 0.0
    %2613 = vmatpush1.msra.mxu0 0.0
    %2614 = vmatprep.subr.mxu0 0.0
    %2615 = vmatpush1.msra.mxu0 0.0
    %2616 = vmatprep.subr.mxu0 0.0
    %2617 = vmatpush1.msra.mxu0 0.0
    %2618 = vmatprep.subr.mxu0 0.0
    %2619 = vmatpush1.msra.mxu0 0.0
    %2620 = vmatprep.subr.mxu0 0.0
    %2621 = vmatpush1.msra.mxu0 0.0
    %2622 = vmatprep.subr.mxu0 0.0
    %2623 = vmatpush1.msra.mxu0 0.0
    %2624 = vmatprep.subr.mxu0 0.0
    %2625 = vmatpush1.msra.mxu0 0.0
    %2626 = vmatprep.subr.mxu0 0.0
    %2627 = vmatpush1.msra.mxu0 0.0
    %2628 = vmatprep.subr.mxu0 0.0
    %2629 = vmatpush1.msra.mxu0 0.0
    %2630 = vmatprep.subr.mxu0 0.0
    %2631 = vmatpush1.msra.mxu0 0.0
    %2632 = vmatprep.subr.mxu0 0.0
    %2633 = vmatpush1.msra.mxu0 0.0
    %2634 = vmatprep.subr.mxu0 0.0
    %2635 = vmatpush1.msra.mxu0 0.0
    %2636 = vmatprep.subr.mxu0 0.0
    %2637 = vmatpush1.msra.mxu0 0.0
    %2638 = vmatprep.subr.mxu0 0.0
    %2639 = vmatpush1.msra.mxu0 0.0
    %2640 = vmatprep.subr.mxu0 0.0
    %2641 = vmatpush1.msra.mxu0 0.0
    %2642 = vmatprep.subr.mxu0 0.0
    %2643 = vmatpush1.msra.mxu0 0.0
    %2644 = vmatprep.subr.mxu0 0.0
    %2645 = vmatpush1.msra.mxu0 0.0
    %2646 = vmatprep.subr.mxu0 0.0
    %2647 = vmatpush1.msra.mxu0 0.0
    %2648 = vmatprep.subr.mxu0 0.0
    %2649 = vmatpush1.msra.mxu0 0.0
    %2650 = vmatprep.subr.mxu0 0.0
    %2651 = vmatpush1.msra.mxu0 0.0
    %2652 = vmatprep.subr.mxu0 0.0
    %2653 = vmatpush1.msra.mxu0 0.0
    %2654 = vmatprep.subr.mxu0 0.0
    %2655 = vmatpush1.msra.mxu0 0.0
    %2656 = vmatprep.subr.mxu0 0.0
    %2657 = vmatpush1.msra.mxu0 0.0
    %2658 = vmatprep.subr.mxu0 0.0
    %2659 = vmatpush1.msra.mxu0 0.0
    %2660 = vmatprep.subr.mxu0 0.0
    %2661 = vmatpush1.msra.mxu0 0.0
    %2662 = vmatprep.mubr.f32.mxu0 0.0
    %2663 = vmatmul.mubr.f32.gmra.mrb[0].mxu0 %v2596
    %v2664 = vpop.f32.mrb[0].mxu0
    %v2665 = vadd.f32 0.0, %v2664
    %v2666 = vpop.f32.mrb[0].mxu0
    %2667 = vdwg.mxu0
    %2668 = vrot.lane.b32.xlu0 %v258, 64
    %v2669 = vpop.permute.xlu0 %2668
    %v2672 = vsel %vm1503, %v1677, 0
    %2674 = vmatprep.subr.mxu0 0.0
    %2675 = vmatpush1.msra.mxu0 %v2669
    %2676 = vmatprep.subr.mxu0 0.0
    %2677 = vmatpush1.msra.mxu0 0.0
    %2678 = vmatprep.subr.mxu0 0.0
    %2679 = vmatpush1.msra.mxu0 0.0
    %2680 = vmatprep.subr.mxu0 0.0
    %2681 = vmatpush1.msra.mxu0 0.0
    %2682 = vmatprep.subr.mxu0 0.0
    %2683 = vmatpush1.msra.mxu0 0.0
    %2684 = vmatprep.subr.mxu0 0.0
    %2685 = vmatpush1.msra.mxu0 0.0
    %2686 = vmatprep.subr.mxu0 0.0
    %2687 = vmatpush1.msra.mxu0 0.0
    %2688 = vmatprep.subr.mxu0 0.0
    %2689 = vmatpush1.msra.mxu0 0.0
    %2690 = vmatprep.subr.mxu0 0.0
    %2691 = vmatpush1.msra.mxu0 0.0
    %2692 = vmatprep.subr.mxu0 0.0
    %2693 = vmatpush1.msra.mxu0 0.0
    %2694 = vmatprep.subr.mxu0 0.0
    %2695 = vmatpush1.msra.mxu0 0.0
    %2696 = vmatprep.subr.mxu0 0.0
    %2697 = vmatpush1.msra.mxu0 0.0
    %2698 = vmatprep.subr.mxu0 0.0
    %2699 = vmatpush1.msra.mxu0 0.0
    %2700 = vmatprep.subr.mxu0 0.0
    %2701 = vmatpush1.msra.mxu0 0.0
    %2702 = vmatprep.subr.mxu0 0.0
    %2703 = vmatpush1.msra.mxu0 0.0
    %2704 = vmatprep.subr.mxu0 0.0
    %2705 = vmatpush1.msra.mxu0 0.0
    %2706 = vmatprep.subr.mxu0 0.0
    %2707 = vmatpush1.msra.mxu0 0.0
    %2708 = vmatprep.subr.mxu0 0.0
    %2709 = vmatpush1.msra.mxu0 0.0
    %2710 = vmatprep.subr.mxu0 0.0
    %2711 = vmatpush1.msra.mxu0 0.0
    %2712 = vmatprep.subr.mxu0 0.0
    %2713 = vmatpush1.msra.mxu0 0.0
    %2714 = vmatprep.subr.mxu0 0.0
    %2715 = vmatpush1.msra.mxu0 0.0
    %2716 = vmatprep.subr.mxu0 0.0
    %2717 = vmatpush1.msra.mxu0 0.0
    %2718 = vmatprep.subr.mxu0 0.0
    %2719 = vmatpush1.msra.mxu0 0.0
    %2720 = vmatprep.subr.mxu0 0.0
    %2721 = vmatpush1.msra.mxu0 0.0
    %2722 = vmatprep.subr.mxu0 0.0
    %2723 = vmatpush1.msra.mxu0 0.0
    %2724 = vmatprep.subr.mxu0 0.0
    %2725 = vmatpush1.msra.mxu0 0.0
    %2726 = vmatprep.subr.mxu0 0.0
    %2727 = vmatpush1.msra.mxu0 0.0
    %2728 = vmatprep.subr.mxu0 0.0
    %2729 = vmatpush1.msra.mxu0 0.0
    %2730 = vmatprep.subr.mxu0 0.0
    %2731 = vmatpush1.msra.mxu0 0.0
    %2732 = vmatprep.subr.mxu0 0.0
    %2733 = vmatpush1.msra.mxu0 0.0
    %2734 = vmatprep.subr.mxu0 0.0
    %2735 = vmatpush1.msra.mxu0 0.0
    %2736 = vmatprep.subr.mxu0 0.0
    %2737 = vmatpush1.msra.mxu0 0.0
    %2738 = vmatprep.mubr.f32.mxu0 0.0
    %2739 = vmatmul.mubr.f32.gmra.mrb[0].mxu0 %v2672
    %v2740 = vpop.f32.mrb[0].mxu0
    %v2741 = vadd.f32 0.0, %v2740
    %v2742 = vpop.f32.mrb[0].mxu0
    %2743 = vdwg.mxu0
    %2744 = vrot.lane.b32.xlu0 %v263, 64
    %v2745 = vpop.permute.xlu0 %2744
    %v2748 = vsel %vm1503, %v1678, 0
    %2750 = vmatprep.subr.mxu0 0.0
    %2751 = vmatpush1.msra.mxu0 %v2745
    %2752 = vmatprep.subr.mxu0 0.0
    %2753 = vmatpush1.msra.mxu0 0.0
    %2754 = vmatprep.subr.mxu0 0.0
    %2755 = vmatpush1.msra.mxu0 0.0
    %2756 = vmatprep.subr.mxu0 0.0
    %2757 = vmatpush1.msra.mxu0 0.0
    %2758 = vmatprep.subr.mxu0 0.0
    %2759 = vmatpush1.msra.mxu0 0.0
    %2760 = vmatprep.subr.mxu0 0.0
    %2761 = vmatpush1.msra.mxu0 0.0
    %2762 = vmatprep.subr.mxu0 0.0
    %2763 = vmatpush1.msra.mxu0 0.0
    %2764 = vmatprep.subr.mxu0 0.0
    %2765 = vmatpush1.msra.mxu0 0.0
    %2766 = vmatprep.subr.mxu0 0.0
    %2767 = vmatpush1.msra.mxu0 0.0
    %2768 = vmatprep.subr.mxu0 0.0
    %2769 = vmatpush1.msra.mxu0 0.0
    %2770 = vmatprep.subr.mxu0 0.0
    %2771 = vmatpush1.msra.mxu0 0.0
    %2772 = vmatprep.subr.mxu0 0.0
    %2773 = vmatpush1.msra.mxu0 0.0
    %2774 = vmatprep.subr.mxu0 0.0
    %2775 = vmatpush1.msra.mxu0 0.0
    %2776 = vmatprep.subr.mxu0 0.0
    %2777 = vmatpush1.msra.mxu0 0.0
    %2778 = vmatprep.subr.mxu0 0.0
    %2779 = vmatpush1.msra.mxu0 0.0
    %2780 = vmatprep.subr.mxu0 0.0
    %2781 = vmatpush1.msra.mxu0 0.0
    %2782 = vmatprep.subr.mxu0 0.0
    %2783 = vmatpush1.msra.mxu0 0.0
    %2784 = vmatprep.subr.mxu0 0.0
    %2785 = vmatpush1.msra.mxu0 0.0
    %2786 = vmatprep.subr.mxu0 0.0
    %2787 = vmatpush1.msra.mxu0 0.0
    %2788 = vmatprep.subr.mxu0 0.0
    %2789 = vmatpush1.msra.mxu0 0.0
    %2790 = vmatprep.subr.mxu0 0.0
    %2791 = vmatpush1.msra.mxu0 0.0
    %2792 = vmatprep.subr.mxu0 0.0
    %2793 = vmatpush1.msra.mxu0 0.0
    %2794 = vmatprep.subr.mxu0 0.0
    %2795 = vmatpush1.msra.mxu0 0.0
    %2796 = vmatprep.subr.mxu0 0.0
    %2797 = vmatpush1.msra.mxu0 0.0
    %2798 = vmatprep.subr.mxu0 0.0
    %2799 = vmatpush1.msra.mxu0 0.0
    %2800 = vmatprep.subr.mxu0 0.0
    %2801 = vmatpush1.msra.mxu0 0.0
    %2802 = vmatprep.subr.mxu0 0.0
    %2803 = vmatpush1.msra.mxu0 0.0
    %2804 = vmatprep.subr.mxu0 0.0
    %2805 = vmatpush1.msra.mxu0 0.0
    %2806 = vmatprep.subr.mxu0 0.0
    %2807 = vmatpush1.msra.mxu0 0.0
    %2808 = vmatprep.subr.mxu0 0.0
    %2809 = vmatpush1.msra.mxu0 0.0
    %2810 = vmatprep.subr.mxu0 0.0
    %2811 = vmatpush1.msra.mxu0 0.0
    %2812 = vmatprep.subr.mxu0 0.0
    %2813 = vmatpush1.msra.mxu0 0.0
    %2814 = vmatprep.mubr.f32.mxu0 0.0
    %2815 = vmatmul.mubr.f32.gmra.mrb[0].mxu0 %v2748
    %v2816 = vpop.f32.mrb[0].mxu0
    %v2817 = vadd.f32 0.0, %v2816
    %v2818 = vpop.f32.mrb[0].mxu0
    %2819 = vdwg.mxu0
    %2820 = vrot.lane.b32.xlu0 %v268, 64
    %v2821 = vpop.permute.xlu0 %2820
    %v2824 = vsel %vm1503, %v1679, 0
    %2826 = vmatprep.subr.mxu0 0.0
    %2827 = vmatpush1.msra.mxu0 %v2821
    %2828 = vmatprep.subr.mxu0 0.0
    %2829 = vmatpush1.msra.mxu0 0.0
    %2830 = vmatprep.subr.mxu0 0.0
    %2831 = vmatpush1.msra.mxu0 0.0
    %2832 = vmatprep.subr.mxu0 0.0
    %2833 = vmatpush1.msra.mxu0 0.0
    %2834 = vmatprep.subr.mxu0 0.0
    %2835 = vmatpush1.msra.mxu0 0.0
    %2836 = vmatprep.subr.mxu0 0.0
    %2837 = vmatpush1.msra.mxu0 0.0
    %2838 = vmatprep.subr.mxu0 0.0
    %2839 = vmatpush1.msra.mxu0 0.0
    %2840 = vmatprep.subr.mxu0 0.0
    %2841 = vmatpush1.msra.mxu0 0.0
    %2842 = vmatprep.subr.mxu0 0.0
    %2843 = vmatpush1.msra.mxu0 0.0
    %2844 = vmatprep.subr.mxu0 0.0
    %2845 = vmatpush1.msra.mxu0 0.0
    %2846 = vmatprep.subr.mxu0 0.0
    %2847 = vmatpush1.msra.mxu0 0.0
    %2848 = vmatprep.subr.mxu0 0.0
    %2849 = vmatpush1.msra.mxu0 0.0
    %2850 = vmatprep.subr.mxu0 0.0
    %2851 = vmatpush1.msra.mxu0 0.0
    %2852 = vmatprep.subr.mxu0 0.0
    %2853 = vmatpush1.msra.mxu0 0.0
    %2854 = vmatprep.subr.mxu0 0.0
    %2855 = vmatpush1.msra.mxu0 0.0
    %2856 = vmatprep.subr.mxu0 0.0
    %2857 = vmatpush1.msra.mxu0 0.0
    %2858 = vmatprep.subr.mxu0 0.0
    %2859 = vmatpush1.msra.mxu0 0.0
    %2860 = vmatprep.subr.mxu0 0.0
    %2861 = vmatpush1.msra.mxu0 0.0
    %2862 = vmatprep.subr.mxu0 0.0
    %2863 = vmatpush1.msra.mxu0 0.0
    %2864 = vmatprep.subr.mxu0 0.0
    %2865 = vmatpush1.msra.mxu0 0.0
    %2866 = vmatprep.subr.mxu0 0.0
    %2867 = vmatpush1.msra.mxu0 0.0
    %2868 = vmatprep.subr.mxu0 0.0
    %2869 = vmatpush1.msra.mxu0 0.0
    %2870 = vmatprep.subr.mxu0 0.0
    %2871 = vmatpush1.msra.mxu0 0.0
    %2872 = vmatprep.subr.mxu0 0.0
    %2873 = vmatpush1.msra.mxu0 0.0
    %2874 = vmatprep.subr.mxu0 0.0
    %2875 = vmatpush1.msra.mxu0 0.0
    %2876 = vmatprep.subr.mxu0 0.0
    %2877 = vmatpush1.msra.mxu0 0.0
    %2878 = vmatprep.subr.mxu0 0.0
    %2879 = vmatpush1.msra.mxu0 0.0
    %2880 = vmatprep.subr.mxu0 0.0
    %2881 = vmatpush1.msra.mxu0 0.0
    %2882 = vmatprep.subr.mxu0 0.0
    %2883 = vmatpush1.msra.mxu0 0.0
    %2884 = vmatprep.subr.mxu0 0.0
    %2885 = vmatpush1.msra.mxu0 0.0
    %2886 = vmatprep.subr.mxu0 0.0
    %2887 = vmatpush1.msra.mxu0 0.0
    %2888 = vmatprep.subr.mxu0 0.0
    %2889 = vmatpush1.msra.mxu0 0.0
    %2890 = vmatprep.mubr.f32.mxu0 0.0
    %2891 = vmatmul.mubr.f32.gmra.mrb[0].mxu0 %v2824
    %v2892 = vpop.f32.mrb[0].mxu0
    %v2893 = vadd.f32 0.0, %v2892
    %v2894 = vpop.f32.mrb[0].mxu0
    %2895 = vdwg.mxu0
    %v2896 = vld [vmem:[%s3] sm:$0x1]
    %v2898 = vlaneseq
    %v2899 = vshrl.u32 %v2898, 7
    %v2900 = vsub.s32 0, %v2899
    %v2901 = vrot.slane %v2896, %v2900
    %v2903 = vmul.f32 %v1753, %v2901
    %v2904 = vmul.f32 %v1829, %v2901
    %v2905 = vmul.f32 %v1905, %v2901
    %v2906 = vmul.f32 %v1981, %v2901
    %v2907 = vmul.f32 %v2057, %v2901
    %v2908 = vmul.f32 %v2133, %v2901
    %v2909 = vmul.f32 %v2209, %v2901
    %v2910 = vmul.f32 %v2285, %v2901
    %v2911 = vmul.f32 %v2361, %v2901
    %v2912 = vmul.f32 %v2437, %v2901
    %v2913 = vmul.f32 %v2513, %v2901
    %v2914 = vmul.f32 %v2589, %v2901
    %v2915 = vmul.f32 %v2665, %v2901
    %v2916 = vmul.f32 %v2741, %v2901
    %v2917 = vmul.f32 %v2817, %v2901
    %v2918 = vmul.f32 %v2893, %v2901
    %v2919 = vsel %vm77, %v2903, 0.0
    %2920 = vadd.xlane.f32.xlu0 %v2919
    %v2921 = vpop.xlane.xlu0 %2920
    %v2922 = vsel %vm77, %v2904, 0.0
    %2923 = vadd.xlane.f32.xlu0 %v2922
    %v2924 = vpop.xlane.xlu0 %2923
    %v2925 = vsel %vm77, %v2905, 0.0
    %2926 = vadd.xlane.f32.xlu0 %v2925
    %v2927 = vpop.xlane.xlu0 %2926
    %v2928 = vsel %vm77, %v2906, 0.0
    %2929 = vadd.xlane.f32.xlu0 %v2928
    %v2930 = vpop.xlane.xlu0 %2929
    %v2931 = vsel %vm77, %v2907, 0.0
    %2932 = vadd.xlane.f32.xlu0 %v2931
    %v2933 = vpop.xlane.xlu0 %2932
    %v2934 = vsel %vm77, %v2908, 0.0
    %2935 = vadd.xlane.f32.xlu0 %v2934
    %v2936 = vpop.xlane.xlu0 %2935
    %v2937 = vsel %vm77, %v2909, 0.0
    %2938 = vadd.xlane.f32.xlu0 %v2937
    %v2939 = vpop.xlane.xlu0 %2938
    %v2940 = vsel %vm77, %v2910, 0.0
    %2941 = vadd.xlane.f32.xlu0 %v2940
    %v2942 = vpop.xlane.xlu0 %2941
    %v2943 = vsel %vm77, %v2911, 0.0
    %2944 = vadd.xlane.f32.xlu0 %v2943
    %v2945 = vpop.xlane.xlu0 %2944
    %v2946 = vsel %vm77, %v2912, 0.0
    %2947 = vadd.xlane.f32.xlu0 %v2946
    %v2948 = vpop.xlane.xlu0 %2947
    %v2949 = vsel %vm77, %v2913, 0.0
    %2950 = vadd.xlane.f32.xlu0 %v2949
    %v2951 = vpop.xlane.xlu0 %2950
    %v2952 = vsel %vm77, %v2914, 0.0
    %2953 = vadd.xlane.f32.xlu0 %v2952
    %v2954 = vpop.xlane.xlu0 %2953
    %v2955 = vsel %vm77, %v2915, 0.0
    %2956 = vadd.xlane.f32.xlu0 %v2955
    %v2957 = vpop.xlane.xlu0 %2956
    %v2958 = vsel %vm77, %v2916, 0.0
    %2959 = vadd.xlane.f32.xlu0 %v2958
    %v2960 = vpop.xlane.xlu0 %2959
    %v2961 = vsel %vm77, %v2917, 0.0
    %2962 = vadd.xlane.f32.xlu0 %v2961
    %v2963 = vpop.xlane.xlu0 %2962
    %v2964 = vsel %vm77, %v2918, 0.0
    %2965 = vadd.xlane.f32.xlu0 %v2964
    %v2966 = vpop.xlane.xlu0 %2965
    %s2967 = sld [smem:[#allocation2]]
    %v2968 = vstv %s2967
    %v2969 = vadd.f32 %v2921, %v2968
    %v2970 = vadd.f32 %v2924, %v2968
    %v2971 = vadd.f32 %v2927, %v2968
    %v2972 = vadd.f32 %v2930, %v2968
    %v2973 = vadd.f32 %v2933, %v2968
    %v2974 = vadd.f32 %v2936, %v2968
    %v2975 = vadd.f32 %v2939, %v2968
    %v2976 = vadd.f32 %v2942, %v2968
    %v2977 = vadd.f32 %v2945, %v2968
    %v2978 = vadd.f32 %v2948, %v2968
    %v2979 = vadd.f32 %v2951, %v2968
    %v2980 = vadd.f32 %v2954, %v2968
    %v2981 = vadd.f32 %v2957, %v2968
    %v2982 = vadd.f32 %v2960, %v2968
    %v2983 = vadd.f32 %v2963, %v2968
    %v2984 = vadd.f32 %v2966, %v2968
    %v3001 = vlaneseq
    %v3002 = vand.u32 %v3001, 127
    %v3003 = vlaneseq
    %v3004 = vshrl.u32 %v3003, 7
    %v3005 = vsub.s32 %v3002, %v3004
    %v3006 = vrot.slane %v2969, %v3005
    %v3007 = vadd.s32 %v3002, 4294967288
    %v3008 = vlaneseq
    %v3009 = vshrl.u32 %v3008, 7
    %v3010 = vsub.s32 %v3007, %v3009
    %v3011 = vrot.slane %v2970, %v3010
    %vm3012 = vcmask 130112
    %v3013 = vsel %vm3012, %v3011, %v3006
    %v3014 = vadd.s32 %v3002, 4294967280
    %v3015 = vlaneseq
    %v3016 = vshrl.u32 %v3015, 7
    %v3017 = vsub.s32 %v3014, %v3016
    %v3018 = vrot.slane %v2971, %v3017
    %vm3019 = vcmask 195712
    %v3020 = vsel %vm3019, %v3018, %v3013
    %v3021 = vadd.s32 %v3002, 4294967272
    %v3022 = vlaneseq
    %v3023 = vshrl.u32 %v3022, 7
    %v3024 = vsub.s32 %v3021, %v3023
    %v3025 = vrot.slane %v2972, %v3024
    %vm3026 = vcmask 261312
    %v3027 = vsel %vm3026, %v3025, %v3020
    %v3028 = vadd.s32 %v3002, 4294967264
    %v3029 = vlaneseq
    %v3030 = vshrl.u32 %v3029, 7
    %v3031 = vsub.s32 %v3028, %v3030
    %v3032 = vrot.slane %v2973, %v3031
    %vm3033 = vcmask 326912
    %v3034 = vsel %vm3033, %v3032, %v3027
    %v3035 = vadd.s32 %v3002, 4294967256
    %v3036 = vlaneseq
    %v3037 = vshrl.u32 %v3036, 7
    %v3038 = vsub.s32 %v3035, %v3037
    %v3039 = vrot.slane %v2974, %v3038
    %vm3040 = vcmask 392512
    %v3041 = vsel %vm3040, %v3039, %v3034
    %v3042 = vadd.s32 %v3002, 4294967248
    %v3043 = vlaneseq
    %v3044 = vshrl.u32 %v3043, 7
    %v3045 = vsub.s32 %v3042, %v3044
    %v3046 = vrot.slane %v2975, %v3045
    %vm3047 = vcmask 458112
    %v3048 = vsel %vm3047, %v3046, %v3041
    %v3049 = vadd.s32 %v3002, 4294967240
    %v3050 = vlaneseq
    %v3051 = vshrl.u32 %v3050, 7
    %v3052 = vsub.s32 %v3049, %v3051
    %v3053 = vrot.slane %v2976, %v3052
    %vm3054 = vcmask 523712
    %v3055 = vsel %vm3054, %v3053, %v3048
    %v3056 = vadd.s32 %v3002, 4294967232
    %v3057 = vlaneseq
    %v3058 = vshrl.u32 %v3057, 7
    %v3059 = vsub.s32 %v3056, %v3058
    %v3060 = vrot.slane %v2977, %v3059
    %vm3061 = vcmask 589312
    %v3062 = vsel %vm3061, %v3060, %v3055
    %v3063 = vadd.s32 %v3002, 4294967224
    %v3064 = vlaneseq
    %v3065 = vshrl.u32 %v3064, 7
    %v3066 = vsub.s32 %v3063, %v3065
    %v3067 = vrot.slane %v2978, %v3066
    %vm3068 = vcmask 654912
    %v3069 = vsel %vm3068, %v3067, %v3062
    %v3070 = vadd.s32 %v3002, 4294967216
    %v3071 = vlaneseq
    %v3072 = vshrl.u32 %v3071, 7
    %v3073 = vsub.s32 %v3070, %v3072
    %v3074 = vrot.slane %v2979, %v3073
    %vm3075 = vcmask 720512
    %v3076 = vsel %vm3075, %v3074, %v3069
    %v3077 = vadd.s32 %v3002, 4294967208
    %v3078 = vlaneseq
    %v3079 = vshrl.u32 %v3078, 7
    %v3080 = vsub.s32 %v3077, %v3079
    %v3081 = vrot.slane %v2980, %v3080
    %vm3082 = vcmask 786112
    %v3083 = vsel %vm3082, %v3081, %v3076
    %v3084 = vadd.s32 %v3002, 4294967200
    %v3085 = vlaneseq
    %v3086 = vshrl.u32 %v3085, 7
    %v3087 = vsub.s32 %v3084, %v3086
    %v3088 = vrot.slane %v2981, %v3087
    %vm3089 = vcmask 851712
    %v3090 = vsel %vm3089, %v3088, %v3083
    %v3091 = vadd.s32 %v3002, 4294967192
    %v3092 = vlaneseq
    %v3093 = vshrl.u32 %v3092, 7
    %v3094 = vsub.s32 %v3091, %v3093
    %v3095 = vrot.slane %v2982, %v3094
    %vm3096 = vcmask 917312
    %v3097 = vsel %vm3096, %v3095, %v3090
    %v3098 = vadd.s32 %v3002, 4294967184
    %v3099 = vlaneseq
    %v3100 = vshrl.u32 %v3099, 7
    %v3101 = vsub.s32 %v3098, %v3100
    %v3102 = vrot.slane %v2983, %v3101
    %vm3103 = vcmask 982912
    %v3104 = vsel %vm3103, %v3102, %v3097
    %v3105 = vadd.s32 %v3002, 4294967176
    %v3106 = vlaneseq
    %v3107 = vshrl.u32 %v3106, 7
    %v3108 = vsub.s32 %v3105, %v3107
    %v3109 = vrot.slane %v2984, %v3108
    %vm3110 = vcmask 1048512
    %v3111 = vsel %vm3110, %v3109, %v3104
    %3113 = vst [vmem:[#allocation8] sm:$0x1] %v3111
    // Predicated region
    $region30: #{tpu_custom_call.1} parent=1 // pred_check
      _
    $region31: #{tpu_custom_call.1} parent=1 // pred_check_branch
      %3115 = sbr.rel (0) target = $region33
    $region32: #{tpu_custom_call.1} parent=1 // pred_region
      %s3117 = ssub.s32 16, 16
      %3118 = vsyncadd [#allocation5], %s3117
      %s3120 = sshll.u32 [#allocation8], 4
      %s3121 = int_to_ptr.vmem [resolvable:$true] %s3120
      %3123 = dma.vmem_to_hbm [thread:$0]  %s3121, 16, %s5, [#allocation5]
    $region33: #{tpu_custom_call.1} parent=1 // pred_fallthru
      _
    // Predicated region
    $region34: #{tpu_custom_call.1} parent=1 // pred_check
      _
    $region35: #{tpu_custom_call.1} parent=1 // pred_check_branch
      %3125 = sbr.rel (0) target = $region37
    $region36: #{tpu_custom_call.1} parent=1 // pred_region
      %3126 = dma.done [#allocation5], 16
    $region37: #{tpu_custom_call.1} parent=1 // pred_fallthru
      _
    %3127 = vsyncpa [#allocation4], 1
    %3128 = vsyncpa [#allocation7], 1
    %3129 = vsyncpa [#allocation5], 1

</llo_original>
